<compile_context>
chip_gen: v5e
topology: v5e:2x2
jax: 0.10.0
libtpu: 0.0.40
codegen_flags: <defaults>
</compile_context>

<pallas_src>
import functools
import math

import jax
import jax.numpy as jnp
from jax import lax
from jax.experimental import pallas as pl
from jax.experimental.pallas import tpu as pltpu


def _pow(x, p):
    pf = float(p)
    if pf.is_integer() and pf >= 0:
        return lax.integer_pow(x, int(pf))
    return x ** pf


def _arctan(x):
    # Cephes-style atanf from VPU/EUP-friendly primitives (no direct Mosaic atan).
    sign = jnp.where(x < 0, -1.0, 1.0)
    ax = jnp.abs(x)
    t3p8 = 2.414213562373095   # tan(3*pi/8)
    tp8 = 0.41421356237309503  # tan(pi/8)
    big = ax > t3p8
    mid = jnp.logical_and(ax > tp8, jnp.logical_not(big))
    y = jnp.where(big, math.pi / 2, jnp.where(mid, math.pi / 4, 0.0))
    xr = jnp.where(big, -pl.reciprocal(ax + 1e-30, approx=True),
                   jnp.where(mid, (ax - 1.0) * pl.reciprocal(ax + 1.0, approx=True), ax))
    z = xr * xr
    poly = ((8.05374449538e-2 * z - 1.38776856032e-1) * z
            + 1.99777106478e-1) * z - 3.33329491539e-1
    return sign * (poly * z * xr + xr + y)


def _tal_kernel(ps_ref, pb_ref, anc_ref, glc_ref, glr_ref, gb_ref, gbt_ref, mg_ref,
                tl_ref, tb_ref, ts_ref, fg_ref, tgi_ref,
                *, topk, alpha, beta, eps):
    nm = gb_ref.shape[1]
    nc = ps_ref.shape[1]
    na = ps_ref.shape[2]

    scores = ps_ref[...][0]                         # (nc, na) f32
    pbox = pb_ref[...][0]                           # (4, na)  f32
    anc = anc_ref[...]                              # (2, na)  f32
    glab_c = jnp.maximum(glc_ref[...][0], 0)        # (nm, 1)  i32, clamped
    glab_r = jnp.maximum(glr_ref[...][0], 0)        # (1, nm)  i32, clamped
    gbox = gb_ref[...][0]                           # (nm, 4)  f32
    gbox_t = gbt_ref[...][0]                        # (4, nm)  f32
    mgt = mg_ref[...][0]                            # (nm, 1)  f32

    ax_ = anc[0:1, :]                               # (1, na)
    ay_ = anc[1:2, :]
    gx1 = gbox[:, 0:1]; gy1 = gbox[:, 1:2]; gx2 = gbox[:, 2:3]; gy2 = gbox[:, 3:4]

    # ---- select_candidates_in_gts & mask_gt (boolean computed once, reused) ----
    dmin = jnp.minimum(jnp.minimum(ax_ - gx1, ay_ - gy1),
                       jnp.minimum(gx2 - ax_, gy2 - ay_))            # (nm, na)
    mask_b = jnp.logical_and(dmin > 1e-9, mgt > 0.0)                 # (nm, na) bool
    mask_f = mask_b.astype(jnp.float32)

    # ---- bbox_scores: gather pd_scores[:, gt_label] via one clamped one-hot matmul ----
    oh_mc = (lax.broadcasted_iota(jnp.int32, (nm, nc), 1) == glab_c).astype(jnp.float32)
    bbox_scores = jnp.dot(oh_mc, scores, preferred_element_type=jnp.float32)  # (nm, na)
    bbox_scores = jnp.where(mask_b, bbox_scores, 0.0)

    # ---- CIoU(gt, pred), broadcast (nm,1) x (1,na); divides -> EUP reciprocal ----
    px1 = pbox[0:1, :]; py1 = pbox[1:2, :]; px2 = pbox[2:3, :]; py2 = pbox[3:4, :]
    ie = 1e-7
    w1 = gx2 - gx1; h1 = gy2 - gy1 + ie
    w2 = px2 - px1; h2 = py2 - py1 + ie
    inter = (jnp.maximum(jnp.minimum(gx2, px2) - jnp.maximum(gx1, px1), 0.0) *
             jnp.maximum(jnp.minimum(gy2, py2) - jnp.maximum(gy1, py1), 0.0))
    union = w1 * h1 + w2 * h2 - inter + ie
    # clamp at 1.0 (exact iou < 1 always) so approx-rcp error can't flip the CIoU alpha term
    iou = jnp.minimum(inter * pl.reciprocal(union, approx=True), 1.0)
    cw = jnp.maximum(gx2, px2) - jnp.minimum(gx1, px1)
    ch = jnp.maximum(gy2, py2) - jnp.minimum(gy1, py1)
    rc2 = pl.reciprocal(cw * cw + ch * ch + ie, approx=True)
    rho2 = ((px1 + px2 - gx1 - gx2) ** 2 + (py1 + py2 - gy1 - gy2) ** 2) * 0.25
    v = (4.0 / (math.pi ** 2)) * (_arctan(w2 * pl.reciprocal(h2, approx=True))
                                  - _arctan(w1 * pl.reciprocal(h1, approx=True))) ** 2
    a_c = v * pl.reciprocal(v - iou + (1.0 + ie), approx=True)
    ciou = iou - (rho2 * rc2 + v * a_c)
    overlaps = jnp.where(mask_b, jnp.maximum(ciou, 0.0), 0.0)         # (nm, na)

    align_metric = _pow(bbox_scores, alpha) * _pow(overlaps, beta)    # (nm, na)

    # ---- select_topk_candidates: iterative max -> indicator of top-k anchors ----
    # TODO(synk): collapse to one fused argmax reduction per iteration once lax.argmax
    # lowering is confirmed in Mosaic; max + first-index keeps lowest-index tie-break
    # (torch.topk tie order is implementation-defined anyway).
    iota_a = lax.broadcasted_iota(jnp.int32, (nm, na), 1)

    def _topk_body(_, carry):
        m, count = carry
        mx = jnp.max(m, axis=-1, keepdims=True)
        first = jnp.min(jnp.where(m == mx, iota_a, na), axis=-1, keepdims=True)
        sel = iota_a == first
        count = count + sel.astype(jnp.float32)
        m = jnp.where(sel, -1.0, m)                 # metrics are >= 0; -1 excludes picks
        return m, count

    _, count = lax.fori_loop(0, topk, _topk_body,
                             (align_metric, jnp.zeros((nm, na), jnp.float32)),
                             unroll=True)
    mask_pos = count * mask_f                                         # (nm, na)

    # ---- select_highest_overlaps ----
    iota_g = lax.broadcasted_iota(jnp.int32, (nm, na), 0)
    fg_sum = jnp.sum(mask_pos, axis=0, keepdims=True)                 # (1, na) pre-resolution
    omax = jnp.max(overlaps, axis=0, keepdims=True)
    max_ov_idx = jnp.min(jnp.where(overlaps == omax, iota_g, nm),
                         axis=0, keepdims=True)
    is_max_ov = (iota_g == max_ov_idx).astype(jnp.float32)
    mask_pos = jnp.where(fg_sum > 1.0, is_max_ov, mask_pos)
    pmax = jnp.max(mask_pos, axis=0, keepdims=True)                   # (1, na) in {0,1}
    fg = pmax                                                         # == sum after resolution
    tgi = jnp.min(jnp.where(mask_pos == pmax, iota_g, nm),
                  axis=0, keepdims=True)                              # (1, na) i32

    # ---- get_targets (lane-dense (4,na)/(nc,na) products; no big in-kernel transposes) ----
    sel_gf = (iota_g == tgi).astype(jnp.float32)                      # (nm, na) one-hot over gt
    tl_f = jnp.dot(glab_r.astype(jnp.float32), sel_gf,
                   preferred_element_type=jnp.float32)                # (1, na)
    tb = jnp.dot(gbox_t, sel_gf, preferred_element_type=jnp.float32)  # (4, na)

    # ---- normalization of target scores ----
    align_pos = align_metric * mask_pos
    pos_align = jnp.max(align_pos, axis=-1, keepdims=True)            # (nm, 1)
    pos_ov = jnp.max(overlaps * mask_pos, axis=-1, keepdims=True)     # (nm, 1)
    norm = jnp.max(align_pos * (pos_ov * pl.reciprocal(pos_align + eps, approx=True)),
                   axis=0, keepdims=True)                             # (1, na)
    sel_scaled = sel_gf * jnp.where(fg > 0.0, norm, 0.0)              # fold fg gate + norm
    oh_cm = (lax.broadcasted_iota(jnp.int32, (nc, nm), 0) == glab_r).astype(jnp.float32)
    ts = jnp.dot(oh_cm, sel_scaled, preferred_element_type=jnp.float32)  # (nc, na)

    tl_ref[0] = tl_f.astype(jnp.int32)
    tb_ref[0] = tb
    ts_ref[0] = ts
    fg_ref[0] = fg
    tgi_ref[0] = tgi


def task_aligned_assigner(pd_scores, pd_bboxes, anc_points, gt_labels, gt_bboxes,
                          mask_gt, *, topk=13, num_classes=80, alpha=1.0, beta=6.0,
                          eps=1e-9):
    bs, na, nc = pd_scores.shape
    nm = gt_bboxes.shape[1]
    if nm == 0:
        bg = jnp.full((bs, na), num_classes, jnp.int32)
        return (bg, jnp.zeros_like(pd_bboxes), jnp.zeros_like(pd_scores),
                jnp.zeros((bs, na), bool), jnp.zeros((bs, na), jnp.int32))

    # Glue: anchors on the lane axis inside the kernel.
    # TODO(synk): these HBM transposes vanish if the detection head emits (bs, nc, na)/(bs, 4, na).
    ps_t = jnp.transpose(pd_scores, (0, 2, 1)).astype(jnp.float32)    # (bs, nc, na)
    pb_t = jnp.transpose(pd_bboxes, (0, 2, 1)).astype(jnp.float32)    # (bs, 4, na)
    anc_t = jnp.transpose(anc_points, (1, 0)).astype(jnp.float32)     # (2, na)
    glc = gt_labels.astype(jnp.int32).reshape(bs, nm, 1)
    glr = gt_labels.astype(jnp.int32).reshape(bs, 1, nm)
    gb = gt_bboxes.astype(jnp.float32)                                # (bs, nm, 4)
    gbt = jnp.transpose(gb, (0, 2, 1))                                # (bs, 4, nm) (tiny)
    mg = mask_gt.astype(jnp.float32).reshape(bs, nm, 1)

    kernel = functools.partial(_tal_kernel, topk=topk, alpha=alpha, beta=beta, eps=eps)

    # Explicit scoped-VMEM sizing (v5e default scope is 16 MiB; keep <= 64 MiB for v7x).
    est_bytes = 4 * (24 * nm * na + 6 * nc * na + 32 * na + 8 * nm * nc) + (2 << 20)
    vmem_limit = int(min(max(est_bytes, 16 << 20), 64 << 20))

    out_shapes = (
        jax.ShapeDtypeStruct((bs, 1, na), jnp.int32),     # target_labels
        jax.ShapeDtypeStruct((bs, 4, na), jnp.float32),   # target_bboxes (coord-major, lane-dense)
        jax.ShapeDtypeStruct((bs, nc, na), jnp.float32),  # target_scores (class-major, lane-dense)
        jax.ShapeDtypeStruct((bs, 1, na), jnp.float32),   # fg_mask (0/1)
        jax.ShapeDtypeStruct((bs, 1, na), jnp.int32),     # target_gt_idx
    )
    in_specs = [
        pl.BlockSpec((1, nc, na), lambda b: (b, 0, 0)),
        pl.BlockSpec((1, 4, na), lambda b: (b, 0, 0)),
        pl.BlockSpec((2, na), lambda b: (0, 0)),
        pl.BlockSpec((1, nm, 1), lambda b: (b, 0, 0)),
        pl.BlockSpec((1, 1, nm), lambda b: (b, 0, 0)),
        pl.BlockSpec((1, nm, 4), lambda b: (b, 0, 0)),
        pl.BlockSpec((1, 4, nm), lambda b: (b, 0, 0)),
        pl.BlockSpec((1, nm, 1), lambda b: (b, 0, 0)),
    ]
    out_specs = [
        pl.BlockSpec((1, 1, na), lambda b: (b, 0, 0)),
        pl.BlockSpec((1, 4, na), lambda b: (b, 0, 0)),
        pl.BlockSpec((1, nc, na), lambda b: (b, 0, 0)),
        pl.BlockSpec((1, 1, na), lambda b: (b, 0, 0)),
        pl.BlockSpec((1, 1, na), lambda b: (b, 0, 0)),
    ]

    tl, tb, ts, fg, tgi = pl.pallas_call(
        kernel,
        out_shape=out_shapes,
        grid_spec=pltpu.PrefetchScalarGridSpec(
            num_scalar_prefetch=0, grid=(bs,),
            in_specs=in_specs, out_specs=out_specs),
        compiler_params=pltpu.CompilerParams(
            dimension_semantics=("parallel",),
            vmem_limit_bytes=vmem_limit),
    )(ps_t, pb_t, anc_t, glc, glr, gb, gbt, mg)

    target_labels = tl[:, 0, :]
    target_bboxes = jnp.transpose(tb, (0, 2, 1))       # (bs, na, 4)
    target_scores = jnp.transpose(ts, (0, 2, 1))       # (bs, na, nc)
    fg_mask = fg[:, 0, :] > 0
    target_gt_idx = tgi[:, 0, :]
    return target_labels, target_bboxes, target_scores, fg_mask, target_gt_idx


if __name__ == "__main__":
    key = jax.random.PRNGKey(0)
    bs, na, nm, nc, topk = 2, 128, 8, 16, 8
    k1, k2, k3, k4, k5, k6 = jax.random.split(key, 6)

    # anchor centers on a 16x8 grid (stride 1) -> 128 anchors
    gx, gy = jnp.meshgrid(jnp.arange(16, dtype=jnp.float32) + 0.5,
                          jnp.arange(8, dtype=jnp.float32) + 0.5)
    anc_points = jnp.stack([gx.reshape(-1), gy.reshape(-1)], axis=-1)  # (128, 2)

    pd_scores = jax.nn.sigmoid(jax.random.normal(k1, (bs, na, nc), jnp.float32))
    ctr = jnp.broadcast_to(anc_points[None], (bs, na, 2)) + \
          0.5 * jax.random.normal(k2, (bs, na, 2), jnp.float32)
    wh = 1.0 + 3.0 * jax.random.uniform(k3, (bs, na, 2), jnp.float32)
    pd_bboxes = jnp.concatenate([ctr - wh / 2, ctr + wh / 2], axis=-1)

    gt_ctr = jnp.stack([jax.random.uniform(k4, (bs, nm)) * 16.0,
                        jax.random.uniform(k5, (bs, nm)) * 8.0], axis=-1)
    gt_wh = 2.0 + 4.0 * jax.random.uniform(k6, (bs, nm, 2), jnp.float32)
    gt_bboxes = jnp.concatenate([gt_ctr - gt_wh / 2, gt_ctr + gt_wh / 2], axis=-1)
    gt_labels = jax.random.randint(jax.random.PRNGKey(1), (bs, nm, 1), 0, nc)
    valid = jnp.array([[1] * 6 + [0] * 2, [1] * 4 + [0] * 4], dtype=jnp.float32)
    mask_gt = valid[:, :, None]                                        # (bs, nm, 1)

    outs = task_aligned_assigner(pd_scores, pd_bboxes, anc_points, gt_labels,
                                 gt_bboxes, mask_gt, topk=topk, num_classes=nc)
    outs = jax.block_until_ready(outs)
    tl, tb, ts, fg, tgi = outs
    assert tl.shape == (bs, na) and tb.shape == (bs, na, 4)
    assert ts.shape == (bs, na, nc) and fg.shape == (bs, na) and tgi.shape == (bs, na)
    print("KERNEL_OK")
</pallas_src>

<mosaic_0001>
module attributes {stable_mosaic.version = 11 : i64} {
  func.func @_tal_kernel(%arg0: i32, %arg1: memref<1x16x128xf32, #tpu.memory_space<vmem>>, %arg2: memref<1x4x128xf32, #tpu.memory_space<vmem>>, %arg3: memref<2x128xf32, #tpu.memory_space<vmem>>, %arg4: memref<1x8x1xi32, #tpu.memory_space<vmem>>, %arg5: memref<1x1x8xi32, #tpu.memory_space<vmem>>, %arg6: memref<1x8x4xf32, #tpu.memory_space<vmem>>, %arg7: memref<1x4x8xf32, #tpu.memory_space<vmem>>, %arg8: memref<1x8x1xf32, #tpu.memory_space<vmem>>, %arg9: memref<1x1x128xi32, #tpu.memory_space<vmem>>, %arg10: memref<1x4x128xf32, #tpu.memory_space<vmem>>, %arg11: memref<1x16x128xf32, #tpu.memory_space<vmem>>, %arg12: memref<1x1x128xf32, #tpu.memory_space<vmem>>, %arg13: memref<1x1x128xi32, #tpu.memory_space<vmem>>) attributes {dimension_semantics = [#tpu.dimension_semantics<parallel>], iteration_bounds = array<i64: 2>, scalar_prefetch = 0 : i64, scratch_operands = 0 : i64, tpu.core_type = #tpu.core_type<tc>, window_params = [{transform_indices = @transform_0, window_bounds = array<i64: 1, 16, 128>}, {transform_indices = @transform_1, window_bounds = array<i64: 1, 4, 128>}, {pipeline_mode = #tpu.pipeline_mode<synchronous>, transform_indices = @transform_2, window_bounds = array<i64: 2, 128>}, {transform_indices = @transform_3, window_bounds = array<i64: 1, 8, 1>}, {transform_indices = @transform_4, window_bounds = array<i64: 1, 1, 8>}, {transform_indices = @transform_5, window_bounds = array<i64: 1, 8, 4>}, {transform_indices = @transform_6, window_bounds = array<i64: 1, 4, 8>}, {transform_indices = @transform_7, window_bounds = array<i64: 1, 8, 1>}, {transform_indices = @transform_8, window_bounds = array<i64: 1, 1, 128>}, {transform_indices = @transform_9, window_bounds = array<i64: 1, 4, 128>}, {transform_indices = @transform_10, window_bounds = array<i64: 1, 16, 128>}, {transform_indices = @transform_11, window_bounds = array<i64: 1, 1, 128>}, {transform_indices = @transform_12, window_bounds = array<i64: 1, 1, 128>}]} {
    %c0 = arith.constant 0 : index
    %c0_0 = arith.constant 0 : index
    %c0_1 = arith.constant 0 : index
    %0 = vector.load %arg1[%c0, %c0_0, %c0_1] : memref<1x16x128xf32, #tpu.memory_space<vmem>>, vector<1x16x128xf32>
    %1 = vector.shape_cast %0 : vector<1x16x128xf32> to vector<16x128xf32>
    %c0_2 = arith.constant 0 : index
    %c0_3 = arith.constant 0 : index
    %c0_4 = arith.constant 0 : index
    %2 = vector.load %arg2[%c0_2, %c0_3, %c0_4] : memref<1x4x128xf32, #tpu.memory_space<vmem>>, vector<1x4x128xf32>
    %3 = vector.shape_cast %2 : vector<1x4x128xf32> to vector<4x128xf32>
    %c0_5 = arith.constant 0 : index
    %c0_6 = arith.constant 0 : index
    %4 = vector.load %arg3[%c0_5, %c0_6] : memref<2x128xf32, #tpu.memory_space<vmem>>, vector<2x128xf32>
    %c0_7 = arith.constant 0 : index
    %c0_8 = arith.constant 0 : index
    %c0_9 = arith.constant 0 : index
    %5 = vector.load %arg4[%c0_7, %c0_8, %c0_9] : memref<1x8x1xi32, #tpu.memory_space<vmem>>, vector<1x8x1xi32>
    %6 = vector.shape_cast %5 : vector<1x8x1xi32> to vector<8x1xi32>
    %c0_i32 = arith.constant 0 : i32
    %7 = vector.broadcast %c0_i32 : i32 to vector<8x1xi32>
    %8 = arith.maxsi %6, %7 : vector<8x1xi32>
    %c0_10 = arith.constant 0 : index
    %c0_11 = arith.constant 0 : index
    %c0_12 = arith.constant 0 : index
    %9 = vector.load %arg5[%c0_10, %c0_11, %c0_12] : memref<1x1x8xi32, #tpu.memory_space<vmem>>, vector<1x1x8xi32>
    %10 = vector.shape_cast %9 : vector<1x1x8xi32> to vector<1x8xi32>
    %c0_i32_13 = arith.constant 0 : i32
    %11 = vector.broadcast %c0_i32_13 : i32 to vector<1x8xi32>
    %12 = arith.maxsi %10, %11 : vector<1x8xi32>
    %c0_14 = arith.constant 0 : index
    %c0_15 = arith.constant 0 : index
    %c0_16 = arith.constant 0 : index
    %13 = vector.load %arg6[%c0_14, %c0_15, %c0_16] : memref<1x8x4xf32, #tpu.memory_space<vmem>>, vector<1x8x4xf32>
    %14 = vector.shape_cast %13 : vector<1x8x4xf32> to vector<8x4xf32>
    %c0_17 = arith.constant 0 : index
    %c0_18 = arith.constant 0 : index
    %c0_19 = arith.constant 0 : index
    %15 = vector.load %arg7[%c0_17, %c0_18, %c0_19] : memref<1x4x8xf32, #tpu.memory_space<vmem>>, vector<1x4x8xf32>
    %16 = vector.shape_cast %15 : vector<1x4x8xf32> to vector<4x8xf32>
    %c0_20 = arith.constant 0 : index
    %c0_21 = arith.constant 0 : index
    %c0_22 = arith.constant 0 : index
    %17 = vector.load %arg8[%c0_20, %c0_21, %c0_22] : memref<1x8x1xf32, #tpu.memory_space<vmem>>, vector<1x8x1xf32>
    %18 = vector.shape_cast %17 : vector<1x8x1xf32> to vector<8x1xf32>
    %19 = vector.extract_strided_slice %4 {offsets = [0, 0], sizes = [1, 128], strides = [1, 1]} : vector<2x128xf32> to vector<1x128xf32>
    %20 = vector.extract_strided_slice %4 {offsets = [1, 0], sizes = [1, 128], strides = [1, 1]} : vector<2x128xf32> to vector<1x128xf32>
    %21 = vector.extract_strided_slice %14 {offsets = [0, 0], sizes = [8, 1], strides = [1, 1]} : vector<8x4xf32> to vector<8x1xf32>
    %22 = vector.extract_strided_slice %14 {offsets = [0, 1], sizes = [8, 1], strides = [1, 1]} : vector<8x4xf32> to vector<8x1xf32>
    %23 = vector.extract_strided_slice %14 {offsets = [0, 2], sizes = [8, 1], strides = [1, 1]} : vector<8x4xf32> to vector<8x1xf32>
    %24 = vector.extract_strided_slice %14 {offsets = [0, 3], sizes = [8, 1], strides = [1, 1]} : vector<8x4xf32> to vector<8x1xf32>
    %25 = vector.broadcast %19 : vector<1x128xf32> to vector<8x128xf32>
    %26 = vector.broadcast %21 : vector<8x1xf32> to vector<8x128xf32>
    %27 = arith.subf %25, %26 : vector<8x128xf32>
    %28 = vector.broadcast %20 : vector<1x128xf32> to vector<8x128xf32>
    %29 = vector.broadcast %22 : vector<8x1xf32> to vector<8x128xf32>
    %30 = arith.subf %28, %29 : vector<8x128xf32>
    %31 = arith.minimumf %27, %30 : vector<8x128xf32>
    %32 = vector.broadcast %23 : vector<8x1xf32> to vector<8x128xf32>
    %33 = vector.broadcast %19 : vector<1x128xf32> to vector<8x128xf32>
    %34 = arith.subf %32, %33 : vector<8x128xf32>
    %35 = vector.broadcast %24 : vector<8x1xf32> to vector<8x128xf32>
    %36 = vector.broadcast %20 : vector<1x128xf32> to vector<8x128xf32>
    %37 = arith.subf %35, %36 : vector<8x128xf32>
    %38 = arith.minimumf %34, %37 : vector<8x128xf32>
    %39 = arith.minimumf %31, %38 : vector<8x128xf32>
    %cst = arith.constant 9.99999971E-10 : f32
    %40 = vector.broadcast %cst : f32 to vector<8x128xf32>
    %41 = arith.cmpf ogt, %39, %40 : vector<8x128xf32>
    %cst_23 = arith.constant 0.000000e+00 : f32
    %42 = vector.broadcast %cst_23 : f32 to vector<8x1xf32>
    %43 = arith.cmpf ogt, %18, %42 : vector<8x1xf32>
    %44 = vector.broadcast %43 : vector<8x1xi1> to vector<8x128xi1>
    %45 = arith.andi %41, %44 : vector<8x128xi1>
    %46 = arith.extui %45 : vector<8x128xi1> to vector<8x128xi32>
    %47 = arith.sitofp %46 : vector<8x128xi32> to vector<8x128xf32>
    %48 = tpu.iota {dimensions = array<i32: 1>} : vector<8x16xi32>
    %49 = vector.broadcast %8 : vector<8x1xi32> to vector<8x16xi32>
    %50 = arith.cmpi eq, %48, %49 : vector<8x16xi32>
    %51 = arith.extui %50 : vector<8x16xi1> to vector<8x16xi32>
    %52 = arith.sitofp %51 : vector<8x16xi32> to vector<8x16xf32>
    %cst_24 = arith.constant dense<0.000000e+00> : vector<8x128xf32>
    %53 = tpu.matmul %52, %1, %cst_24 {dimension_numbers = #tpu.dot_dimension_numbers<[1], [0], [0], [1], [0, 0, 1, 1], [], []>} : vector<8x16xf32>, vector<16x128xf32>, vector<8x128xf32> -> vector<8x128xf32>
    %cst_25 = arith.constant 0.000000e+00 : f32
    %54 = vector.broadcast %cst_25 : f32 to vector<8x128xf32>
    %55 = arith.select %45, %53, %54 : vector<8x128xi1>, vector<8x128xf32>
    %56 = vector.extract_strided_slice %3 {offsets = [0, 0], sizes = [1, 128], strides = [1, 1]} : vector<4x128xf32> to vector<1x128xf32>
    %57 = vector.extract_strided_slice %3 {offsets = [1, 0], sizes = [1, 128], strides = [1, 1]} : vector<4x128xf32> to vector<1x128xf32>
    %58 = vector.extract_strided_slice %3 {offsets = [2, 0], sizes = [1, 128], strides = [1, 1]} : vector<4x128xf32> to vector<1x128xf32>
    %59 = vector.extract_strided_slice %3 {offsets = [3, 0], sizes = [1, 128], strides = [1, 1]} : vector<4x128xf32> to vector<1x128xf32>
    %60 = arith.subf %23, %21 : vector<8x1xf32>
    %61 = arith.subf %24, %22 : vector<8x1xf32>
    %cst_26 = arith.constant 1.000000e-07 : f32
    %62 = vector.broadcast %cst_26 : f32 to vector<8x1xf32>
    %63 = arith.addf %61, %62 : vector<8x1xf32>
    %64 = arith.subf %58, %56 : vector<1x128xf32>
    %65 = arith.subf %59, %57 : vector<1x128xf32>
    %cst_27 = arith.constant 1.000000e-07 : f32
    %66 = vector.broadcast %cst_27 : f32 to vector<1x128xf32>
    %67 = arith.addf %65, %66 : vector<1x128xf32>
    %68 = vector.broadcast %23 : vector<8x1xf32> to vector<8x128xf32>
    %69 = vector.broadcast %58 : vector<1x128xf32> to vector<8x128xf32>
    %70 = arith.minimumf %68, %69 : vector<8x128xf32>
    %71 = vector.broadcast %21 : vector<8x1xf32> to vector<8x128xf32>
    %72 = vector.broadcast %56 : vector<1x128xf32> to vector<8x128xf32>
    %73 = arith.maximumf %71, %72 : vector<8x128xf32>
    %74 = arith.subf %70, %73 : vector<8x128xf32>
    %cst_28 = arith.constant 0.000000e+00 : f32
    %75 = vector.broadcast %cst_28 : f32 to vector<8x128xf32>
    %76 = arith.maximumf %74, %75 : vector<8x128xf32>
    %77 = vector.broadcast %24 : vector<8x1xf32> to vector<8x128xf32>
    %78 = vector.broadcast %59 : vector<1x128xf32> to vector<8x128xf32>
    %79 = arith.minimumf %77, %78 : vector<8x128xf32>
    %80 = vector.broadcast %22 : vector<8x1xf32> to vector<8x128xf32>
    %81 = vector.broadcast %57 : vector<1x128xf32> to vector<8x128xf32>
    %82 = arith.maximumf %80, %81 : vector<8x128xf32>
    %83 = arith.subf %79, %82 : vector<8x128xf32>
    %cst_29 = arith.constant 0.000000e+00 : f32
    %84 = vector.broadcast %cst_29 : f32 to vector<8x128xf32>
    %85 = arith.maximumf %83, %84 : vector<8x128xf32>
    %86 = arith.mulf %76, %85 : vector<8x128xf32>
    %87 = arith.mulf %60, %63 : vector<8x1xf32>
    %88 = arith.mulf %64, %67 : vector<1x128xf32>
    %89 = vector.broadcast %87 : vector<8x1xf32> to vector<8x128xf32>
    %90 = vector.broadcast %88 : vector<1x128xf32> to vector<8x128xf32>
    %91 = arith.addf %89, %90 : vector<8x128xf32>
    %92 = arith.subf %91, %86 : vector<8x128xf32>
    %cst_30 = arith.constant 1.000000e-07 : f32
    %93 = vector.broadcast %cst_30 : f32 to vector<8x128xf32>
    %94 = arith.addf %92, %93 : vector<8x128xf32>
    %95 = tpu.reciprocal %94 {approx = true} : vector<8x128xf32> -> vector<8x128xf32>
    %96 = arith.mulf %86, %95 : vector<8x128xf32>
    %cst_31 = arith.constant 1.000000e+00 : f32
    %97 = vector.broadcast %cst_31 : f32 to vector<8x128xf32>
    %98 = arith.minimumf %96, %97 : vector<8x128xf32>
    %99 = vector.broadcast %23 : vector<8x1xf32> to vector<8x128xf32>
    %100 = vector.broadcast %58 : vector<1x128xf32> to vector<8x128xf32>
    %101 = arith.maximumf %99, %100 : vector<8x128xf32>
    %102 = vector.broadcast %21 : vector<8x1xf32> to vector<8x128xf32>
    %103 = vector.broadcast %56 : vector<1x128xf32> to vector<8x128xf32>
    %104 = arith.minimumf %102, %103 : vector<8x128xf32>
    %105 = arith.subf %101, %104 : vector<8x128xf32>
    %106 = vector.broadcast %24 : vector<8x1xf32> to vector<8x128xf32>
    %107 = vector.broadcast %59 : vector<1x128xf32> to vector<8x128xf32>
    %108 = arith.maximumf %106, %107 : vector<8x128xf32>
    %109 = vector.broadcast %22 : vector<8x1xf32> to vector<8x128xf32>
    %110 = vector.broadcast %57 : vector<1x128xf32> to vector<8x128xf32>
    %111 = arith.minimumf %109, %110 : vector<8x128xf32>
    %112 = arith.subf %108, %111 : vector<8x128xf32>
    %113 = arith.mulf %105, %105 : vector<8x128xf32>
    %114 = arith.mulf %112, %112 : vector<8x128xf32>
    %115 = arith.addf %113, %114 : vector<8x128xf32>
    %cst_32 = arith.constant 1.000000e-07 : f32
    %116 = vector.broadcast %cst_32 : f32 to vector<8x128xf32>
    %117 = arith.addf %115, %116 : vector<8x128xf32>
    %118 = tpu.reciprocal %117 {approx = true} : vector<8x128xf32> -> vector<8x128xf32>
    %119 = arith.addf %56, %58 : vector<1x128xf32>
    %120 = vector.broadcast %119 : vector<1x128xf32> to vector<8x128xf32>
    %121 = vector.broadcast %21 : vector<8x1xf32> to vector<8x128xf32>
    %122 = arith.subf %120, %121 : vector<8x128xf32>
    %123 = vector.broadcast %23 : vector<8x1xf32> to vector<8x128xf32>
    %124 = arith.subf %122, %123 : vector<8x128xf32>
    %125 = arith.mulf %124, %124 : vector<8x128xf32>
    %126 = arith.addf %57, %59 : vector<1x128xf32>
    %127 = vector.broadcast %126 : vector<1x128xf32> to vector<8x128xf32>
    %128 = vector.broadcast %22 : vector<8x1xf32> to vector<8x128xf32>
    %129 = arith.subf %127, %128 : vector<8x128xf32>
    %130 = vector.broadcast %24 : vector<8x1xf32> to vector<8x128xf32>
    %131 = arith.subf %129, %130 : vector<8x128xf32>
    %132 = arith.mulf %131, %131 : vector<8x128xf32>
    %133 = arith.addf %125, %132 : vector<8x128xf32>
    %cst_33 = arith.constant 2.500000e-01 : f32
    %134 = vector.broadcast %cst_33 : f32 to vector<8x128xf32>
    %135 = arith.mulf %133, %134 : vector<8x128xf32>
    %136 = tpu.reciprocal %67 {approx = true} : vector<1x128xf32> -> vector<1x128xf32>
    %137 = arith.mulf %64, %136 : vector<1x128xf32>
    %cst_34 = arith.constant 0.000000e+00 : f32
    %138 = vector.broadcast %cst_34 : f32 to vector<1x128xf32>
    %139 = arith.cmpf olt, %137, %138 : vector<1x128xf32>
    %cst_35 = arith.constant -1.000000e+00 : f32
    %cst_36 = arith.constant 1.000000e+00 : f32
    %140 = vector.broadcast %cst_35 : f32 to vector<1x128xf32>
    %141 = vector.broadcast %cst_36 : f32 to vector<1x128xf32>
    %142 = arith.select %139, %140, %141 : vector<1x128xi1>, vector<1x128xf32>
    %143 = math.absf %137 : vector<1x128xf32>
    %cst_37 = arith.constant 2.41421366 : f32
    %144 = vector.broadcast %cst_37 : f32 to vector<1x128xf32>
    %145 = arith.cmpf ogt, %143, %144 : vector<1x128xf32>
    %cst_38 = arith.constant 0.414213568 : f32
    %146 = vector.broadcast %cst_38 : f32 to vector<1x128xf32>
    %147 = arith.cmpf ogt, %143, %146 : vector<1x128xf32>
    %cst_39 = arith.constant dense<true> : vector<1x128xi1>
    %148 = arith.xori %145, %cst_39 : vector<1x128xi1>
    %149 = arith.andi %147, %148 : vector<1x128xi1>
    %cst_40 = arith.constant 0.785398185 : f32
    %cst_41 = arith.constant 0.000000e+00 : f32
    %150 = vector.broadcast %cst_40 : f32 to vector<1x128xf32>
    %151 = vector.broadcast %cst_41 : f32 to vector<1x128xf32>
    %152 = arith.select %149, %150, %151 : vector<1x128xi1>, vector<1x128xf32>
    %cst_42 = arith.constant 1.57079637 : f32
    %153 = vector.broadcast %cst_42 : f32 to vector<1x128xf32>
    %154 = arith.select %145, %153, %152 : vector<1x128xi1>, vector<1x128xf32>
    %cst_43 = arith.constant 1.000000e-30 : f32
    %155 = vector.broadcast %cst_43 : f32 to vector<1x128xf32>
    %156 = arith.addf %143, %155 : vector<1x128xf32>
    %157 = tpu.reciprocal %156 {approx = true} : vector<1x128xf32> -> vector<1x128xf32>
    %cst_44 = arith.constant 0.000000e+00 : f32
    %158 = vector.broadcast %cst_44 : f32 to vector<1x128xf32>
    %159 = arith.subf %158, %157 : vector<1x128xf32>
    %cst_45 = arith.constant 1.000000e+00 : f32
    %160 = vector.broadcast %cst_45 : f32 to vector<1x128xf32>
    %161 = arith.subf %143, %160 : vector<1x128xf32>
    %cst_46 = arith.constant 1.000000e+00 : f32
    %162 = vector.broadcast %cst_46 : f32 to vector<1x128xf32>
    %163 = arith.addf %143, %162 : vector<1x128xf32>
    %164 = tpu.reciprocal %163 {approx = true} : vector<1x128xf32> -> vector<1x128xf32>
    %165 = arith.mulf %161, %164 : vector<1x128xf32>
    %166 = arith.select %149, %165, %143 : vector<1x128xi1>, vector<1x128xf32>
    %167 = arith.select %145, %159, %166 : vector<1x128xi1>, vector<1x128xf32>
    %168 = arith.mulf %167, %167 : vector<1x128xf32>
    %cst_47 = arith.constant 0.0805374458 : f32
    %169 = vector.broadcast %cst_47 : f32 to vector<1x128xf32>
    %170 = arith.mulf %169, %168 : vector<1x128xf32>
    %cst_48 = arith.constant 0.138776854 : f32
    %171 = vector.broadcast %cst_48 : f32 to vector<1x128xf32>
    %172 = arith.subf %170, %171 : vector<1x128xf32>
    %173 = arith.mulf %172, %168 : vector<1x128xf32>
    %cst_49 = arith.constant 0.199777111 : f32
    %174 = vector.broadcast %cst_49 : f32 to vector<1x128xf32>
    %175 = arith.addf %173, %174 : vector<1x128xf32>
    %176 = arith.mulf %175, %168 : vector<1x128xf32>
    %cst_50 = arith.constant 0.333329499 : f32
    %177 = vector.broadcast %cst_50 : f32 to vector<1x128xf32>
    %178 = arith.subf %176, %177 : vector<1x128xf32>
    %179 = arith.mulf %178, %168 : vector<1x128xf32>
    %180 = arith.mulf %179, %167 : vector<1x128xf32>
    %181 = arith.addf %180, %167 : vector<1x128xf32>
    %182 = arith.addf %181, %154 : vector<1x128xf32>
    %183 = arith.mulf %142, %182 : vector<1x128xf32>
    %184 = tpu.reciprocal %63 {approx = true} : vector<8x1xf32> -> vector<8x1xf32>
    %185 = arith.mulf %60, %184 : vector<8x1xf32>
    %cst_51 = arith.constant 0.000000e+00 : f32
    %186 = vector.broadcast %cst_51 : f32 to vector<8x1xf32>
    %187 = arith.cmpf olt, %185, %186 : vector<8x1xf32>
    %cst_52 = arith.constant -1.000000e+00 : f32
    %cst_53 = arith.constant 1.000000e+00 : f32
    %188 = vector.broadcast %cst_52 : f32 to vector<8x1xf32>
    %189 = vector.broadcast %cst_53 : f32 to vector<8x1xf32>
    %190 = arith.select %187, %188, %189 : vector<8x1xi1>, vector<8x1xf32>
    %191 = math.absf %185 : vector<8x1xf32>
    %cst_54 = arith.constant 2.41421366 : f32
    %192 = vector.broadcast %cst_54 : f32 to vector<8x1xf32>
    %193 = arith.cmpf ogt, %191, %192 : vector<8x1xf32>
    %cst_55 = arith.constant 0.414213568 : f32
    %194 = vector.broadcast %cst_55 : f32 to vector<8x1xf32>
    %195 = arith.cmpf ogt, %191, %194 : vector<8x1xf32>
    %cst_56 = arith.constant dense<true> : vector<8x1xi1>
    %196 = arith.xori %193, %cst_56 : vector<8x1xi1>
    %197 = arith.andi %195, %196 : vector<8x1xi1>
    %cst_57 = arith.constant 0.785398185 : f32
    %cst_58 = arith.constant 0.000000e+00 : f32
    %198 = vector.broadcast %cst_57 : f32 to vector<8x1xf32>
    %199 = vector.broadcast %cst_58 : f32 to vector<8x1xf32>
    %200 = arith.select %197, %198, %199 : vector<8x1xi1>, vector<8x1xf32>
    %cst_59 = arith.constant 1.57079637 : f32
    %201 = vector.broadcast %cst_59 : f32 to vector<8x1xf32>
    %202 = arith.select %193, %201, %200 : vector<8x1xi1>, vector<8x1xf32>
    %cst_60 = arith.constant 1.000000e-30 : f32
    %203 = vector.broadcast %cst_60 : f32 to vector<8x1xf32>
    %204 = arith.addf %191, %203 : vector<8x1xf32>
    %205 = tpu.reciprocal %204 {approx = true} : vector<8x1xf32> -> vector<8x1xf32>
    %cst_61 = arith.constant 0.000000e+00 : f32
    %206 = vector.broadcast %cst_61 : f32 to vector<8x1xf32>
    %207 = arith.subf %206, %205 : vector<8x1xf32>
    %cst_62 = arith.constant 1.000000e+00 : f32
    %208 = vector.broadcast %cst_62 : f32 to vector<8x1xf32>
    %209 = arith.subf %191, %208 : vector<8x1xf32>
    %cst_63 = arith.constant 1.000000e+00 : f32
    %210 = vector.broadcast %cst_63 : f32 to vector<8x1xf32>
    %211 = arith.addf %191, %210 : vector<8x1xf32>
    %212 = tpu.reciprocal %211 {approx = true} : vector<8x1xf32> -> vector<8x1xf32>
    %213 = arith.mulf %209, %212 : vector<8x1xf32>
    %214 = arith.select %197, %213, %191 : vector<8x1xi1>, vector<8x1xf32>
    %215 = arith.select %193, %207, %214 : vector<8x1xi1>, vector<8x1xf32>
    %216 = arith.mulf %215, %215 : vector<8x1xf32>
    %cst_64 = arith.constant 0.0805374458 : f32
    %217 = vector.broadcast %cst_64 : f32 to vector<8x1xf32>
    %218 = arith.mulf %217, %216 : vector<8x1xf32>
    %cst_65 = arith.constant 0.138776854 : f32
    %219 = vector.broadcast %cst_65 : f32 to vector<8x1xf32>
    %220 = arith.subf %218, %219 : vector<8x1xf32>
    %221 = arith.mulf %220, %216 : vector<8x1xf32>
    %cst_66 = arith.constant 0.199777111 : f32
    %222 = vector.broadcast %cst_66 : f32 to vector<8x1xf32>
    %223 = arith.addf %221, %222 : vector<8x1xf32>
    %224 = arith.mulf %223, %216 : vector<8x1xf32>
    %cst_67 = arith.constant 0.333329499 : f32
    %225 = vector.broadcast %cst_67 : f32 to vector<8x1xf32>
    %226 = arith.subf %224, %225 : vector<8x1xf32>
    %227 = arith.mulf %226, %216 : vector<8x1xf32>
    %228 = arith.mulf %227, %215 : vector<8x1xf32>
    %229 = arith.addf %228, %215 : vector<8x1xf32>
    %230 = arith.addf %229, %202 : vector<8x1xf32>
    %231 = arith.mulf %190, %230 : vector<8x1xf32>
    %232 = vector.broadcast %183 : vector<1x128xf32> to vector<8x128xf32>
    %233 = vector.broadcast %231 : vector<8x1xf32> to vector<8x128xf32>
    %234 = arith.subf %232, %233 : vector<8x128xf32>
    %235 = arith.mulf %234, %234 : vector<8x128xf32>
    %cst_68 = arith.constant 0.405284733 : f32
    %236 = vector.broadcast %cst_68 : f32 to vector<8x128xf32>
    %237 = arith.mulf %236, %235 : vector<8x128xf32>
    %238 = arith.subf %237, %98 : vector<8x128xf32>
    %cst_69 = arith.constant 1.00000012 : f32
    %239 = vector.broadcast %cst_69 : f32 to vector<8x128xf32>
    %240 = arith.addf %238, %239 : vector<8x128xf32>
    %241 = tpu.reciprocal %240 {approx = true} : vector<8x128xf32> -> vector<8x128xf32>
    %242 = arith.mulf %237, %241 : vector<8x128xf32>
    %243 = arith.mulf %135, %118 : vector<8x128xf32>
    %244 = arith.mulf %237, %242 : vector<8x128xf32>
    %245 = arith.addf %243, %244 : vector<8x128xf32>
    %246 = arith.subf %98, %245 : vector<8x128xf32>
    %cst_70 = arith.constant 0.000000e+00 : f32
    %247 = vector.broadcast %cst_70 : f32 to vector<8x128xf32>
    %248 = arith.maximumf %246, %247 : vector<8x128xf32>
    %cst_71 = arith.constant 0.000000e+00 : f32
    %249 = vector.broadcast %cst_71 : f32 to vector<8x128xf32>
    %250 = arith.select %45, %248, %249 : vector<8x128xi1>, vector<8x128xf32>
    %251 = arith.mulf %250, %250 : vector<8x128xf32>
    %252 = arith.mulf %251, %251 : vector<8x128xf32>
    %253 = arith.mulf %251, %252 : vector<8x128xf32>
    %254 = arith.mulf %55, %253 : vector<8x128xf32>
    %255 = tpu.iota {dimensions = array<i32: 1>} : vector<8x128xi32>
    %cst_72 = arith.constant 0.000000e+00 : f32
    %256 = vector.broadcast %cst_72 : f32 to vector<8x128xf32>
    %c0_i32_73 = arith.constant 0 : i32
    %cst_74 = arith.constant dense<0xFF800000> : vector<8xf32>
    %257 = vector.multi_reduction <maximumf>, %254, %cst_74 [1] : vector<8x128xf32> to vector<8xf32>
    %258 = vector.shape_cast %257 : vector<8xf32> to vector<8x1xf32>
    %259 = vector.broadcast %258 : vector<8x1xf32> to vector<8x128xf32>
    %260 = arith.cmpf oeq, %254, %259 : vector<8x128xf32>
    %c128_i32 = arith.constant 128 : i32
    %261 = vector.broadcast %c128_i32 : i32 to vector<8x128xi32>
    %262 = arith.select %260, %255, %261 : vector<8x128xi1>, vector<8x128xi32>
    %cst_75 = arith.constant dense<2147483647> : vector<8xi32>
    %263 = vector.multi_reduction <minsi>, %262, %cst_75 [1] : vector<8x128xi32> to vector<8xi32>
    %264 = vector.shape_cast %263 : vector<8xi32> to vector<8x1xi32>
    %265 = vector.broadcast %264 : vector<8x1xi32> to vector<8x128xi32>
    %266 = arith.cmpi eq, %255, %265 : vector<8x128xi32>
    %267 = arith.extui %266 : vector<8x128xi1> to vector<8x128xi32>
    %268 = arith.sitofp %267 : vector<8x128xi32> to vector<8x128xf32>
    %269 = arith.addf %256, %268 : vector<8x128xf32>
    %cst_76 = arith.constant -1.000000e+00 : f32
    %270 = vector.broadcast %cst_76 : f32 to vector<8x128xf32>
    %271 = arith.select %266, %270, %254 : vector<8x128xi1>, vector<8x128xf32>
    %c1_i32 = arith.constant 1 : i32
    %cst_77 = arith.constant dense<0xFF800000> : vector<8xf32>
    %272 = vector.multi_reduction <maximumf>, %271, %cst_77 [1] : vector<8x128xf32> to vector<8xf32>
    %273 = vector.shape_cast %272 : vector<8xf32> to vector<8x1xf32>
    %274 = vector.broadcast %273 : vector<8x1xf32> to vector<8x128xf32>
    %275 = arith.cmpf oeq, %271, %274 : vector<8x128xf32>
    %c128_i32_78 = arith.constant 128 : i32
    %276 = vector.broadcast %c128_i32_78 : i32 to vector<8x128xi32>
    %277 = arith.select %275, %255, %276 : vector<8x128xi1>, vector<8x128xi32>
    %cst_79 = arith.constant dense<2147483647> : vector<8xi32>
    %278 = vector.multi_reduction <minsi>, %277, %cst_79 [1] : vector<8x128xi32> to vector<8xi32>
    %279 = vector.shape_cast %278 : vector<8xi32> to vector<8x1xi32>
    %280 = vector.broadcast %279 : vector<8x1xi32> to vector<8x128xi32>
    %281 = arith.cmpi eq, %255, %280 : vector<8x128xi32>
    %282 = arith.extui %281 : vector<8x128xi1> to vector<8x128xi32>
    %283 = arith.sitofp %282 : vector<8x128xi32> to vector<8x128xf32>
    %284 = arith.addf %269, %283 : vector<8x128xf32>
    %cst_80 = arith.constant -1.000000e+00 : f32
    %285 = vector.broadcast %cst_80 : f32 to vector<8x128xf32>
    %286 = arith.select %281, %285, %271 : vector<8x128xi1>, vector<8x128xf32>
    %c2_i32 = arith.constant 2 : i32
    %cst_81 = arith.constant dense<0xFF800000> : vector<8xf32>
    %287 = vector.multi_reduction <maximumf>, %286, %cst_81 [1] : vector<8x128xf32> to vector<8xf32>
    %288 = vector.shape_cast %287 : vector<8xf32> to vector<8x1xf32>
    %289 = vector.broadcast %288 : vector<8x1xf32> to vector<8x128xf32>
    %290 = arith.cmpf oeq, %286, %289 : vector<8x128xf32>
    %c128_i32_82 = arith.constant 128 : i32
    %291 = vector.broadcast %c128_i32_82 : i32 to vector<8x128xi32>
    %292 = arith.select %290, %255, %291 : vector<8x128xi1>, vector<8x128xi32>
    %cst_83 = arith.constant dense<2147483647> : vector<8xi32>
    %293 = vector.multi_reduction <minsi>, %292, %cst_83 [1] : vector<8x128xi32> to vector<8xi32>
    %294 = vector.shape_cast %293 : vector<8xi32> to vector<8x1xi32>
    %295 = vector.broadcast %294 : vector<8x1xi32> to vector<8x128xi32>
    %296 = arith.cmpi eq, %255, %295 : vector<8x128xi32>
    %297 = arith.extui %296 : vector<8x128xi1> to vector<8x128xi32>
    %298 = arith.sitofp %297 : vector<8x128xi32> to vector<8x128xf32>
    %299 = arith.addf %284, %298 : vector<8x128xf32>
    %cst_84 = arith.constant -1.000000e+00 : f32
    %300 = vector.broadcast %cst_84 : f32 to vector<8x128xf32>
    %301 = arith.select %296, %300, %286 : vector<8x128xi1>, vector<8x128xf32>
    %c3_i32 = arith.constant 3 : i32
    %cst_85 = arith.constant dense<0xFF800000> : vector<8xf32>
    %302 = vector.multi_reduction <maximumf>, %301, %cst_85 [1] : vector<8x128xf32> to vector<8xf32>
    %303 = vector.shape_cast %302 : vector<8xf32> to vector<8x1xf32>
    %304 = vector.broadcast %303 : vector<8x1xf32> to vector<8x128xf32>
    %305 = arith.cmpf oeq, %301, %304 : vector<8x128xf32>
    %c128_i32_86 = arith.constant 128 : i32
    %306 = vector.broadcast %c128_i32_86 : i32 to vector<8x128xi32>
    %307 = arith.select %305, %255, %306 : vector<8x128xi1>, vector<8x128xi32>
    %cst_87 = arith.constant dense<2147483647> : vector<8xi32>
    %308 = vector.multi_reduction <minsi>, %307, %cst_87 [1] : vector<8x128xi32> to vector<8xi32>
    %309 = vector.shape_cast %308 : vector<8xi32> to vector<8x1xi32>
    %310 = vector.broadcast %309 : vector<8x1xi32> to vector<8x128xi32>
    %311 = arith.cmpi eq, %255, %310 : vector<8x128xi32>
    %312 = arith.extui %311 : vector<8x128xi1> to vector<8x128xi32>
    %313 = arith.sitofp %312 : vector<8x128xi32> to vector<8x128xf32>
    %314 = arith.addf %299, %313 : vector<8x128xf32>
    %cst_88 = arith.constant -1.000000e+00 : f32
    %315 = vector.broadcast %cst_88 : f32 to vector<8x128xf32>
    %316 = arith.select %311, %315, %301 : vector<8x128xi1>, vector<8x128xf32>
    %c4_i32 = arith.constant 4 : i32
    %cst_89 = arith.constant dense<0xFF800000> : vector<8xf32>
    %317 = vector.multi_reduction <maximumf>, %316, %cst_89 [1] : vector<8x128xf32> to vector<8xf32>
    %318 = vector.shape_cast %317 : vector<8xf32> to vector<8x1xf32>
    %319 = vector.broadcast %318 : vector<8x1xf32> to vector<8x128xf32>
    %320 = arith.cmpf oeq, %316, %319 : vector<8x128xf32>
    %c128_i32_90 = arith.constant 128 : i32
    %321 = vector.broadcast %c128_i32_90 : i32 to vector<8x128xi32>
    %322 = arith.select %320, %255, %321 : vector<8x128xi1>, vector<8x128xi32>
    %cst_91 = arith.constant dense<2147483647> : vector<8xi32>
    %323 = vector.multi_reduction <minsi>, %322, %cst_91 [1] : vector<8x128xi32> to vector<8xi32>
    %324 = vector.shape_cast %323 : vector<8xi32> to vector<8x1xi32>
    %325 = vector.broadcast %324 : vector<8x1xi32> to vector<8x128xi32>
    %326 = arith.cmpi eq, %255, %325 : vector<8x128xi32>
    %327 = arith.extui %326 : vector<8x128xi1> to vector<8x128xi32>
    %328 = arith.sitofp %327 : vector<8x128xi32> to vector<8x128xf32>
    %329 = arith.addf %314, %328 : vector<8x128xf32>
    %cst_92 = arith.constant -1.000000e+00 : f32
    %330 = vector.broadcast %cst_92 : f32 to vector<8x128xf32>
    %331 = arith.select %326, %330, %316 : vector<8x128xi1>, vector<8x128xf32>
    %c5_i32 = arith.constant 5 : i32
    %cst_93 = arith.constant dense<0xFF800000> : vector<8xf32>
    %332 = vector.multi_reduction <maximumf>, %331, %cst_93 [1] : vector<8x128xf32> to vector<8xf32>
    %333 = vector.shape_cast %332 : vector<8xf32> to vector<8x1xf32>
    %334 = vector.broadcast %333 : vector<8x1xf32> to vector<8x128xf32>
    %335 = arith.cmpf oeq, %331, %334 : vector<8x128xf32>
    %c128_i32_94 = arith.constant 128 : i32
    %336 = vector.broadcast %c128_i32_94 : i32 to vector<8x128xi32>
    %337 = arith.select %335, %255, %336 : vector<8x128xi1>, vector<8x128xi32>
    %cst_95 = arith.constant dense<2147483647> : vector<8xi32>
    %338 = vector.multi_reduction <minsi>, %337, %cst_95 [1] : vector<8x128xi32> to vector<8xi32>
    %339 = vector.shape_cast %338 : vector<8xi32> to vector<8x1xi32>
    %340 = vector.broadcast %339 : vector<8x1xi32> to vector<8x128xi32>
    %341 = arith.cmpi eq, %255, %340 : vector<8x128xi32>
    %342 = arith.extui %341 : vector<8x128xi1> to vector<8x128xi32>
    %343 = arith.sitofp %342 : vector<8x128xi32> to vector<8x128xf32>
    %344 = arith.addf %329, %343 : vector<8x128xf32>
    %cst_96 = arith.constant -1.000000e+00 : f32
    %345 = vector.broadcast %cst_96 : f32 to vector<8x128xf32>
    %346 = arith.select %341, %345, %331 : vector<8x128xi1>, vector<8x128xf32>
    %c6_i32 = arith.constant 6 : i32
    %cst_97 = arith.constant dense<0xFF800000> : vector<8xf32>
    %347 = vector.multi_reduction <maximumf>, %346, %cst_97 [1] : vector<8x128xf32> to vector<8xf32>
    %348 = vector.shape_cast %347 : vector<8xf32> to vector<8x1xf32>
    %349 = vector.broadcast %348 : vector<8x1xf32> to vector<8x128xf32>
    %350 = arith.cmpf oeq, %346, %349 : vector<8x128xf32>
    %c128_i32_98 = arith.constant 128 : i32
    %351 = vector.broadcast %c128_i32_98 : i32 to vector<8x128xi32>
    %352 = arith.select %350, %255, %351 : vector<8x128xi1>, vector<8x128xi32>
    %cst_99 = arith.constant dense<2147483647> : vector<8xi32>
    %353 = vector.multi_reduction <minsi>, %352, %cst_99 [1] : vector<8x128xi32> to vector<8xi32>
    %354 = vector.shape_cast %353 : vector<8xi32> to vector<8x1xi32>
    %355 = vector.broadcast %354 : vector<8x1xi32> to vector<8x128xi32>
    %356 = arith.cmpi eq, %255, %355 : vector<8x128xi32>
    %357 = arith.extui %356 : vector<8x128xi1> to vector<8x128xi32>
    %358 = arith.sitofp %357 : vector<8x128xi32> to vector<8x128xf32>
    %359 = arith.addf %344, %358 : vector<8x128xf32>
    %cst_100 = arith.constant -1.000000e+00 : f32
    %360 = vector.broadcast %cst_100 : f32 to vector<8x128xf32>
    %361 = arith.select %356, %360, %346 : vector<8x128xi1>, vector<8x128xf32>
    %c7_i32 = arith.constant 7 : i32
    %cst_101 = arith.constant dense<0xFF800000> : vector<8xf32>
    %362 = vector.multi_reduction <maximumf>, %361, %cst_101 [1] : vector<8x128xf32> to vector<8xf32>
    %363 = vector.shape_cast %362 : vector<8xf32> to vector<8x1xf32>
    %364 = vector.broadcast %363 : vector<8x1xf32> to vector<8x128xf32>
    %365 = arith.cmpf oeq, %361, %364 : vector<8x128xf32>
    %c128_i32_102 = arith.constant 128 : i32
    %366 = vector.broadcast %c128_i32_102 : i32 to vector<8x128xi32>
    %367 = arith.select %365, %255, %366 : vector<8x128xi1>, vector<8x128xi32>
    %cst_103 = arith.constant dense<2147483647> : vector<8xi32>
    %368 = vector.multi_reduction <minsi>, %367, %cst_103 [1] : vector<8x128xi32> to vector<8xi32>
    %369 = vector.shape_cast %368 : vector<8xi32> to vector<8x1xi32>
    %370 = vector.broadcast %369 : vector<8x1xi32> to vector<8x128xi32>
    %371 = arith.cmpi eq, %255, %370 : vector<8x128xi32>
    %372 = arith.extui %371 : vector<8x128xi1> to vector<8x128xi32>
    %373 = arith.sitofp %372 : vector<8x128xi32> to vector<8x128xf32>
    %374 = arith.addf %359, %373 : vector<8x128xf32>
    %cst_104 = arith.constant -1.000000e+00 : f32
    %375 = vector.broadcast %cst_104 : f32 to vector<8x128xf32>
    %376 = arith.select %371, %375, %361 : vector<8x128xi1>, vector<8x128xf32>
    %377 = arith.mulf %374, %47 : vector<8x128xf32>
    %378 = tpu.iota {dimensions = array<i32: 0>} : vector<8x128xi32>
    %cst_105 = arith.constant dense<0.000000e+00> : vector<128xf32>
    %379 = vector.multi_reduction <add>, %377, %cst_105 [0] : vector<8x128xf32> to vector<128xf32>
    %380 = vector.shape_cast %379 : vector<128xf32> to vector<1x128xf32>
    %cst_106 = arith.constant dense<0xFF800000> : vector<128xf32>
    %381 = vector.multi_reduction <maximumf>, %250, %cst_106 [0] : vector<8x128xf32> to vector<128xf32>
    %382 = vector.shape_cast %381 : vector<128xf32> to vector<1x128xf32>
    %383 = vector.broadcast %382 : vector<1x128xf32> to vector<8x128xf32>
    %384 = arith.cmpf oeq, %250, %383 : vector<8x128xf32>
    %c8_i32 = arith.constant 8 : i32
    %385 = vector.broadcast %c8_i32 : i32 to vector<8x128xi32>
    %386 = arith.select %384, %378, %385 : vector<8x128xi1>, vector<8x128xi32>
    %cst_107 = arith.constant dense<2147483647> : vector<128xi32>
    %387 = vector.multi_reduction <minsi>, %386, %cst_107 [0] : vector<8x128xi32> to vector<128xi32>
    %388 = vector.shape_cast %387 : vector<128xi32> to vector<1x128xi32>
    %389 = vector.broadcast %388 : vector<1x128xi32> to vector<8x128xi32>
    %390 = arith.cmpi eq, %378, %389 : vector<8x128xi32>
    %391 = arith.extui %390 : vector<8x128xi1> to vector<8x128xi32>
    %392 = arith.sitofp %391 : vector<8x128xi32> to vector<8x128xf32>
    %cst_108 = arith.constant 1.000000e+00 : f32
    %393 = vector.broadcast %cst_108 : f32 to vector<1x128xf32>
    %394 = arith.cmpf ogt, %380, %393 : vector<1x128xf32>
    %395 = vector.shape_cast %394 : vector<1x128xi1> to vector<1x128xi1>
    %396 = vector.broadcast %395 : vector<1x128xi1> to vector<8x128xi1>
    %397 = arith.select %396, %392, %377 : vector<8x128xi1>, vector<8x128xf32>
    %cst_109 = arith.constant dense<0xFF800000> : vector<128xf32>
    %398 = vector.multi_reduction <maximumf>, %397, %cst_109 [0] : vector<8x128xf32> to vector<128xf32>
    %399 = vector.shape_cast %398 : vector<128xf32> to vector<1x128xf32>
    %400 = vector.broadcast %399 : vector<1x128xf32> to vector<8x128xf32>
    %401 = arith.cmpf oeq, %397, %400 : vector<8x128xf32>
    %c8_i32_110 = arith.constant 8 : i32
    %402 = vector.broadcast %c8_i32_110 : i32 to vector<8x128xi32>
    %403 = arith.select %401, %378, %402 : vector<8x128xi1>, vector<8x128xi32>
    %cst_111 = arith.constant dense<2147483647> : vector<128xi32>
    %404 = vector.multi_reduction <minsi>, %403, %cst_111 [0] : vector<8x128xi32> to vector<128xi32>
    %405 = vector.shape_cast %404 : vector<128xi32> to vector<1x128xi32>
    %406 = vector.broadcast %405 : vector<1x128xi32> to vector<8x128xi32>
    %407 = arith.cmpi eq, %378, %406 : vector<8x128xi32>
    %408 = arith.extui %407 : vector<8x128xi1> to vector<8x128xi32>
    %409 = arith.sitofp %408 : vector<8x128xi32> to vector<8x128xf32>
    %410 = arith.sitofp %12 : vector<1x8xi32> to vector<1x8xf32>
    %cst_112 = arith.constant dense<0.000000e+00> : vector<1x128xf32>
    %411 = tpu.matmul %410, %409, %cst_112 {dimension_numbers = #tpu.dot_dimension_numbers<[1], [0], [0], [1], [0, 0, 1, 1], [], []>} : vector<1x8xf32>, vector<8x128xf32>, vector<1x128xf32> -> vector<1x128xf32>
    %cst_113 = arith.constant dense<0.000000e+00> : vector<4x128xf32>
    %412 = tpu.matmul %16, %409, %cst_113 {dimension_numbers = #tpu.dot_dimension_numbers<[1], [0], [0], [1], [0, 0, 1, 1], [], []>} : vector<4x8xf32>, vector<8x128xf32>, vector<4x128xf32> -> vector<4x128xf32>
    %413 = arith.mulf %254, %397 : vector<8x128xf32>
    %cst_114 = arith.constant dense<0xFF800000> : vector<8xf32>
    %414 = vector.multi_reduction <maximumf>, %413, %cst_114 [1] : vector<8x128xf32> to vector<8xf32>
    %415 = vector.shape_cast %414 : vector<8xf32> to vector<8x1xf32>
    %416 = arith.mulf %250, %397 : vector<8x128xf32>
    %cst_115 = arith.constant dense<0xFF800000> : vector<8xf32>
    %417 = vector.multi_reduction <maximumf>, %416, %cst_115 [1] : vector<8x128xf32> to vector<8xf32>
    %418 = vector.shape_cast %417 : vector<8xf32> to vector<8x1xf32>
    %cst_116 = arith.constant 9.99999971E-10 : f32
    %419 = vector.broadcast %cst_116 : f32 to vector<8x1xf32>
    %420 = arith.addf %415, %419 : vector<8x1xf32>
    %421 = tpu.reciprocal %420 {approx = true} : vector<8x1xf32> -> vector<8x1xf32>
    %422 = arith.mulf %418, %421 : vector<8x1xf32>
    %423 = vector.broadcast %422 : vector<8x1xf32> to vector<8x128xf32>
    %424 = arith.mulf %413, %423 : vector<8x128xf32>
    %cst_117 = arith.constant dense<0xFF800000> : vector<128xf32>
    %425 = vector.multi_reduction <maximumf>, %424, %cst_117 [0] : vector<8x128xf32> to vector<128xf32>
    %426 = vector.shape_cast %425 : vector<128xf32> to vector<1x128xf32>
    %cst_118 = arith.constant 0.000000e+00 : f32
    %427 = vector.broadcast %cst_118 : f32 to vector<1x128xf32>
    %428 = arith.cmpf ogt, %399, %427 : vector<1x128xf32>
    %cst_119 = arith.constant 0.000000e+00 : f32
    %429 = vector.broadcast %cst_119 : f32 to vector<1x128xf32>
    %430 = arith.select %428, %426, %429 : vector<1x128xi1>, vector<1x128xf32>
    %431 = vector.broadcast %430 : vector<1x128xf32> to vector<8x128xf32>
    %432 = arith.mulf %409, %431 : vector<8x128xf32>
    %433 = tpu.iota {dimensions = array<i32: 0>} : vector<16x8xi32>
    %434 = vector.broadcast %12 : vector<1x8xi32> to vector<16x8xi32>
    %435 = arith.cmpi eq, %433, %434 : vector<16x8xi32>
    %436 = arith.extui %435 : vector<16x8xi1> to vector<16x8xi32>
    %437 = arith.sitofp %436 : vector<16x8xi32> to vector<16x8xf32>
    %cst_120 = arith.constant dense<0.000000e+00> : vector<16x128xf32>
    %438 = tpu.matmul %437, %432, %cst_120 {dimension_numbers = #tpu.dot_dimension_numbers<[1], [0], [0], [1], [0, 0, 1, 1], [], []>} : vector<16x8xf32>, vector<8x128xf32>, vector<16x128xf32> -> vector<16x128xf32>
    %439 = arith.fptosi %411 : vector<1x128xf32> to vector<1x128xi32>
    %c0_121 = arith.constant 0 : index
    %c0_122 = arith.constant 0 : index
    %c0_123 = arith.constant 0 : index
    %440 = vector.load %arg9[%c0_121, %c0_122, %c0_123] : memref<1x1x128xi32, #tpu.memory_space<vmem>>, vector<1x1x128xi32>
    %441 = vector.shape_cast %440 : vector<1x1x128xi32> to vector<1x128xi32>
    %442 = vector.shape_cast %439 : vector<1x128xi32> to vector<1x1x128xi32>
    tpu.vector_store %arg9[%c0_121, %c0_122, %c0_123], %442 {strides = array<i32>} : memref<1x1x128xi32, #tpu.memory_space<vmem>>, vector<1x1x128xi32>,
    %c0_124 = arith.constant 0 : index
    %c0_125 = arith.constant 0 : index
    %c0_126 = arith.constant 0 : index
    %443 = vector.load %arg10[%c0_124, %c0_125, %c0_126] : memref<1x4x128xf32, #tpu.memory_space<vmem>>, vector<1x4x128xf32>
    %444 = vector.shape_cast %443 : vector<1x4x128xf32> to vector<4x128xf32>
    %445 = vector.shape_cast %412 : vector<4x128xf32> to vector<1x4x128xf32>
    tpu.vector_store %arg10[%c0_124, %c0_125, %c0_126], %445 {strides = array<i32>} : memref<1x4x128xf32, #tpu.memory_space<vmem>>, vector<1x4x128xf32>,
    %c0_127 = arith.constant 0 : index
    %c0_128 = arith.constant 0 : index
    %c0_129 = arith.constant 0 : index
    %446 = vector.load %arg11[%c0_127, %c0_128, %c0_129] : memref<1x16x128xf32, #tpu.memory_space<vmem>>, vector<1x16x128xf32>
    %447 = vector.shape_cast %446 : vector<1x16x128xf32> to vector<16x128xf32>
    %448 = vector.shape_cast %438 : vector<16x128xf32> to vector<1x16x128xf32>
    tpu.vector_store %arg11[%c0_127, %c0_128, %c0_129], %448 {strides = array<i32>} : memref<1x16x128xf32, #tpu.memory_space<vmem>>, vector<1x16x128xf32>,
    %c0_130 = arith.constant 0 : index
    %c0_131 = arith.constant 0 : index
    %c0_132 = arith.constant 0 : index
    %449 = vector.load %arg12[%c0_130, %c0_131, %c0_132] : memref<1x1x128xf32, #tpu.memory_space<vmem>>, vector<1x1x128xf32>
    %450 = vector.shape_cast %449 : vector<1x1x128xf32> to vector<1x128xf32>
    %451 = vector.shape_cast %399 : vector<1x128xf32> to vector<1x1x128xf32>
    tpu.vector_store %arg12[%c0_130, %c0_131, %c0_132], %451 {strides = array<i32>} : memref<1x1x128xf32, #tpu.memory_space<vmem>>, vector<1x1x128xf32>,
    %c0_133 = arith.constant 0 : index
    %c0_134 = arith.constant 0 : index
    %c0_135 = arith.constant 0 : index
    %452 = vector.load %arg13[%c0_133, %c0_134, %c0_135] : memref<1x1x128xi32, #tpu.memory_space<vmem>>, vector<1x1x128xi32>
    %453 = vector.shape_cast %452 : vector<1x1x128xi32> to vector<1x128xi32>
    %454 = vector.shape_cast %405 : vector<1x128xi32> to vector<1x1x128xi32>
    tpu.vector_store %arg13[%c0_133, %c0_134, %c0_135], %454 {strides = array<i32>} : memref<1x1x128xi32, #tpu.memory_space<vmem>>, vector<1x1x128xi32>,
    return
  }
  func.func @transform_0(%arg0: i32) -> (i32, i32, i32) {
    %c0_i32 = arith.constant 0 : i32
    %c0_i32_0 = arith.constant 0 : i32
    %c0_i32_1 = arith.constant 0 : i32
    return %arg0, %c0_i32, %c0_i32_0 : i32, i32, i32
  }
  func.func @transform_1(%arg0: i32) -> (i32, i32, i32) {
    %c0_i32 = arith.constant 0 : i32
    %c0_i32_0 = arith.constant 0 : i32
    %c0_i32_1 = arith.constant 0 : i32
    return %arg0, %c0_i32, %c0_i32_0 : i32, i32, i32
  }
  func.func @transform_2(%arg0: i32) -> (i32, i32) {
    %c0_i32 = arith.constant 0 : i32
    %c0_i32_0 = arith.constant 0 : i32
    %c0_i32_1 = arith.constant 0 : i32
    return %c0_i32, %c0_i32_0 : i32, i32
  }
  func.func @transform_3(%arg0: i32) -> (i32, i32, i32) {
    %c0_i32 = arith.constant 0 : i32
    %c0_i32_0 = arith.constant 0 : i32
    %c0_i32_1 = arith.constant 0 : i32
    return %arg0, %c0_i32, %c0_i32_0 : i32, i32, i32
  }
  func.func @transform_4(%arg0: i32) -> (i32, i32, i32) {
    %c0_i32 = arith.constant 0 : i32
    %c0_i32_0 = arith.constant 0 : i32
    %c0_i32_1 = arith.constant 0 : i32
    return %arg0, %c0_i32, %c0_i32_0 : i32, i32, i32
  }
  func.func @transform_5(%arg0: i32) -> (i32, i32, i32) {
    %c0_i32 = arith.constant 0 : i32
    %c0_i32_0 = arith.constant 0 : i32
    %c0_i32_1 = arith.constant 0 : i32
    return %arg0, %c0_i32, %c0_i32_0 : i32, i32, i32
  }
  func.func @transform_6(%arg0: i32) -> (i32, i32, i32) {
    %c0_i32 = arith.constant 0 : i32
    %c0_i32_0 = arith.constant 0 : i32
    %c0_i32_1 = arith.constant 0 : i32
    return %arg0, %c0_i32, %c0_i32_0 : i32, i32, i32
  }
  func.func @transform_7(%arg0: i32) -> (i32, i32, i32) {
    %c0_i32 = arith.constant 0 : i32
    %c0_i32_0 = arith.constant 0 : i32
    %c0_i32_1 = arith.constant 0 : i32
    return %arg0, %c0_i32, %c0_i32_0 : i32, i32, i32
  }
  func.func @transform_8(%arg0: i32) -> (i32, i32, i32) {
    %c0_i32 = arith.constant 0 : i32
    %c0_i32_0 = arith.constant 0 : i32
    %c0_i32_1 = arith.constant 0 : i32
    return %arg0, %c0_i32, %c0_i32_0 : i32, i32, i32
  }
  func.func @transform_9(%arg0: i32) -> (i32, i32, i32) {
    %c0_i32 = arith.constant 0 : i32
    %c0_i32_0 = arith.constant 0 : i32
    %c0_i32_1 = arith.constant 0 : i32
    return %arg0, %c0_i32, %c0_i32_0 : i32, i32, i32
  }
  func.func @transform_10(%arg0: i32) -> (i32, i32, i32) {
    %c0_i32 = arith.constant 0 : i32
    %c0_i32_0 = arith.constant 0 : i32
    %c0_i32_1 = arith.constant 0 : i32
    return %arg0, %c0_i32, %c0_i32_0 : i32, i32, i32
  }
  func.func @transform_11(%arg0: i32) -> (i32, i32, i32) {
    %c0_i32 = arith.constant 0 : i32
    %c0_i32_0 = arith.constant 0 : i32
    %c0_i32_1 = arith.constant 0 : i32
    return %arg0, %c0_i32, %c0_i32_0 : i32, i32, i32
  }
  func.func @transform_12(%arg0: i32) -> (i32, i32, i32) {
    %c0_i32 = arith.constant 0 : i32
    %c0_i32_0 = arith.constant 0 : i32
    %c0_i32_1 = arith.constant 0 : i32
    return %arg0, %c0_i32, %c0_i32_0 : i32, i32, i32
  }
}

</mosaic_0001>

<llo_original>
// kernel: tpu_custom_call.1
$region0: #{tpu_custom_call.1}
  #allocation0 [shape = 'u32[]', space=smem, size = 0x4, offset = 0x4, fixed_abs, tag = 'smem constant byte address 0x4 - core index']
  #allocation1 [shape = 'u32[72,128]{1,0:T(1,128)}', space=vmem, size = 0x9000, scoped, tag = 'internal scratch']
  %s0 = inlined_call_operand.vmem [shape: f32[2,16,128], index: 0, kind: input, shape index: {}]
  %s1 = inlined_call_operand.vmem [shape: f32[2,4,128], index: 1, kind: input, shape index: {}]
  %s2 = inlined_call_operand.vmem [shape: f32[2,128], index: 2, kind: input, shape index: {}]
  %s3 = inlined_call_operand.vmem [shape: s32[2,8,1], index: 3, kind: input, shape index: {}]
  %s4 = inlined_call_operand.hbm [shape: s32[2,1,8], index: 4, kind: input, shape index: {}]
  %s5 = inlined_call_operand.vmem [shape: f32[2,8,4], index: 5, kind: input, shape index: {}]
  %s6 = inlined_call_operand.vmem [shape: f32[2,4,8], index: 6, kind: input, shape index: {}]
  %s7 = inlined_call_operand.vmem [shape: f32[2,8,1], index: 7, kind: input, shape index: {}]
  %s8 = inlined_call_operand.hbm [shape: s32[2,1,128], index: 8, kind: output, shape index: {0}]
  %s9 = inlined_call_operand.hbm [shape: f32[2,4,128], index: 9, kind: output, shape index: {1}]
  %s10 = inlined_call_operand.hbm [shape: f32[2,16,128], index: 10, kind: output, shape index: {2}]
  %s11 = inlined_call_operand.hbm [shape: f32[2,1,128], index: 11, kind: output, shape index: {3}]
  %s12 = inlined_call_operand.hbm [shape: s32[2,1,128], index: 12, kind: output, shape index: {4}]
  %13 = xla_tuple %s8, %s9, %s10, %s11, %s12
  %s14 = sld [smem:[#allocation0]]
  $region101: #{tpu_custom_call.1} parent=0
    _
  %s16 = ssub.s32 1, %s14
  %s17 = scalar_select 0, %s16, %s14
  $region1: #{tpu_custom_call.1} parent=0
    #allocation2 [shape = 'u8[1024]{0}', space=vmem, size = 0x400, scoped, tag = 'input window, operand 4']
    #allocation3 [shape = 's32[2]{0}', space=sflag, size = 0x8, scoped, tag = 'scoped memory for tpu_custom_call.1']
    #allocation4 [shape = 's32[2]{0}', space=sflag, size = 0x8, scoped, tag = 'scoped memory for tpu_custom_call.1']
    #allocation5 [shape = 'u8[1024]{0}', space=vmem, size = 0x400, scoped, tag = 'output window, operand 0']
    #allocation6 [shape = 'u8[4096]{0}', space=vmem, size = 0x1000, scoped, tag = 'output window, operand 1']
    #allocation7 [shape = 's32[2]{0}', space=sflag, size = 0x8, scoped, tag = 'scoped memory for tpu_custom_call.1']
    #allocation8 [shape = 'u8[16384]{0}', space=vmem, size = 0x4000, scoped, tag = 'output window, operand 2']
    #allocation9 [shape = 'u8[1024]{0}', space=vmem, size = 0x400, scoped, tag = 'output window, operand 3']
    #allocation10 [shape = 's32[2]{0}', space=sflag, size = 0x8, scoped, tag = 'scoped memory for tpu_custom_call.1']
    #allocation11 [shape = 'u8[1024]{0}', space=vmem, size = 0x400, scoped, tag = 'output window, operand 4']
    %18 = vsyncpa [#allocation3], 0
    %s19 = scalar_lea.sflag [#allocation3], 1
    %20 = vsyncpa %s19, 0
    %21 = vsyncpa [#allocation4], 0
    %s22 = scalar_lea.sflag [#allocation4], 1
    %23 = vsyncpa %s22, 0
    %24 = vsyncpa [#allocation7], 0
    %s25 = scalar_lea.sflag [#allocation7], 1
    %26 = vsyncpa %s25, 0
    %27 = vsyncpa [#allocation10], 0
    %s28 = scalar_lea.sflag [#allocation10], 1
    %29 = vsyncpa %s28, 0
    loop: start=0, step=1, limit=4
    $region2: #{tpu_custom_call.1} parent=1 // loop_pre_header
      _
    $region3: #{tpu_custom_call.1} parent=1 // loop_header
      %s31 = sphi 0, %s35
      %p32 = scmp.ge.s32.totalorder %s31, 4
      %s41 = sphi 0, %s43
      %s44 = sphi 0, %s41
      %s45 = sphi 0, %s44
      %s61 = sphi 0, %s45
      %s67 = sphi 0, %s69
      %s70 = sphi 0, %s67
      %s71 = sphi 0, %s70
      %s87 = sphi 0, %s71
      %s91 = sphi 0, %s91
      %s93 = sphi 0, %s91
      %s94 = sphi 0, %s93
      %s108 = sphi 0, %s94
      %s114 = sphi 0, %s116
      %s117 = sphi 0, %s114
      %s118 = sphi 0, %s117
      %s134 = sphi 0, %s118
      %s140 = sphi 0, %s142
      %s143 = sphi 0, %s140
      %s144 = sphi 0, %s143
      %s160 = sphi 0, %s144
      %s166 = sphi 0, %s168
      %s169 = sphi 0, %s166
      %s170 = sphi 0, %s169
      %s186 = sphi 0, %s170
      %s192 = sphi 0, %s194
      %s195 = sphi 0, %s192
      %s196 = sphi 0, %s195
      %s212 = sphi 0, %s196
      %s218 = sphi 0, %s220
      %s221 = sphi 0, %s218
      %s222 = sphi 0, %s221
      %s238 = sphi 0, %s222
      %s244 = sphi 0, %s246
      %s247 = sphi 0, %s244
      %s248 = sphi 0, %s247
      %s264 = sphi 0, %s248
      %s270 = sphi 0, %s272
      %s273 = sphi 0, %s270
      %s274 = sphi 0, %s273
      %s290 = sphi 0, %s274
      %s296 = sphi 0, %s298
      %s299 = sphi 0, %s296
      %s300 = sphi 0, %s299
      %s316 = sphi 0, %s300
      %s322 = sphi 0, %s324
      %s325 = sphi 0, %s322
      %s326 = sphi 0, %s325
      %s342 = sphi 0, %s326
      %s348 = sphi 0, %s350
      %s351 = sphi 0, %s348
      %s352 = sphi 0, %s351
      %s368 = sphi 0, %s352
    $region4: #{tpu_custom_call.1} parent=1 // loop_header_branch
      %34 = sbr.rel (%p32) target = $region8
    $region5: #{tpu_custom_call.1} parent=1 // loop_body
      %s36 = ssub.s32 %s31, 1
      %s37 = ssub.s32 %s31, 2
      %s38 = sadd.s32 %s31, 1
      %s39 = ssub.s32 %s31, %s38
      %p40 = scmp.eq.s32.totalorder %s39, 0
      %s42 = sadd.s32 %s41, 1
      %s43 = scalar_select %p40, %s41, %s42
      %p46 = pneg %p40
      %p47 = scmp.eq.s32.totalorder %s31, 1
      %p48 = por %p46, %p47
      %p49 = scmp.ne.s32.totalorder %s41, %s44
      %p50 = scmp.eq.s32.totalorder %s31, 0
      %p51 = por %p49, %p50
      %p52 = scmp.ne.s32.totalorder %s41, %s44
      %p53 = scmp.eq.s32.totalorder %s36, 1
      %p54 = por %p52, %p53
      %p55 = scmp.ne.s32.totalorder %s44, %s45
      %p56 = scmp.eq.s32.totalorder %s36, 0
      %p57 = por %p55, %p56
      %p58 = scmp.ne.s32.totalorder %s44, %s45
      %p59 = scmp.eq.s32.totalorder %s37, 1
      %p60 = por %p58, %p59
      %p62 = scmp.ne.s32.totalorder %s45, %s61
      %p63 = scmp.eq.s32.totalorder %s37, 0
      %p64 = por %p62, %p63
      %s65 = ssub.s32 %s31, %s38
      %p66 = scmp.eq.s32.totalorder %s65, 0
      %s68 = sadd.s32 %s67, 1
      %s69 = scalar_select %p66, %s67, %s68
      %p72 = pneg %p66
      %p73 = scmp.eq.s32.totalorder %s31, 1
      %p74 = por %p72, %p73
      %p75 = scmp.ne.s32.totalorder %s67, %s70
      %p76 = scmp.eq.s32.totalorder %s31, 0
      %p77 = por %p75, %p76
      %p78 = scmp.ne.s32.totalorder %s67, %s70
      %p79 = scmp.eq.s32.totalorder %s36, 1
      %p80 = por %p78, %p79
      %p81 = scmp.ne.s32.totalorder %s70, %s71
      %p82 = scmp.eq.s32.totalorder %s36, 0
      %p83 = por %p81, %p82
      %p84 = scmp.ne.s32.totalorder %s70, %s71
      %p85 = scmp.eq.s32.totalorder %s37, 1
      %p86 = por %p84, %p85
      %p88 = scmp.ne.s32.totalorder %s71, %s87
      %p89 = scmp.eq.s32.totalorder %s37, 0
      %p90 = por %p88, %p89
      %s92 = sadd.s32 %s91, 1
      %p95 = scmp.eq.s32.totalorder %s31, 1
      %p96 = scmp.ne.s32.totalorder %s91, %s93
      %p97 = scmp.eq.s32.totalorder %s31, 0
      %p98 = por %p96, %p97
      %p99 = scmp.ne.s32.totalorder %s91, %s93
      %p100 = scmp.eq.s32.totalorder %s36, 1
      %p101 = por %p99, %p100
      %p102 = scmp.ne.s32.totalorder %s93, %s94
      %p103 = scmp.eq.s32.totalorder %s36, 0
      %p104 = por %p102, %p103
      %p105 = scmp.ne.s32.totalorder %s93, %s94
      %p106 = scmp.eq.s32.totalorder %s37, 1
      %p107 = por %p105, %p106
      %p109 = scmp.ne.s32.totalorder %s94, %s108
      %p110 = scmp.eq.s32.totalorder %s37, 0
      %p111 = por %p109, %p110
      %s112 = ssub.s32 %s31, %s38
      %p113 = scmp.eq.s32.totalorder %s112, 0
      %s115 = sadd.s32 %s114, 1
      %s116 = scalar_select %p113, %s114, %s115
      %p119 = pneg %p113
      %p120 = scmp.eq.s32.totalorder %s31, 1
      %p121 = por %p119, %p120
      %p122 = scmp.ne.s32.totalorder %s114, %s117
      %p123 = scmp.eq.s32.totalorder %s31, 0
      %p124 = por %p122, %p123
      %p125 = scmp.ne.s32.totalorder %s114, %s117
      %p126 = scmp.eq.s32.totalorder %s36, 1
      %p127 = por %p125, %p126
      %p128 = scmp.ne.s32.totalorder %s117, %s118
      %p129 = scmp.eq.s32.totalorder %s36, 0
      %p130 = por %p128, %p129
      %p131 = scmp.ne.s32.totalorder %s117, %s118
      %p132 = scmp.eq.s32.totalorder %s37, 1
      %p133 = por %p131, %p132
      %p135 = scmp.ne.s32.totalorder %s118, %s134
      %p136 = scmp.eq.s32.totalorder %s37, 0
      %p137 = por %p135, %p136
      %s138 = ssub.s32 %s31, %s38
      %p139 = scmp.eq.s32.totalorder %s138, 0
      %s141 = sadd.s32 %s140, 1
      %s142 = scalar_select %p139, %s140, %s141
      %p145 = pneg %p139
      %p146 = scmp.eq.s32.totalorder %s31, 1
      %p147 = por %p145, %p146
      %p148 = scmp.ne.s32.totalorder %s140, %s143
      %p149 = scmp.eq.s32.totalorder %s31, 0
      %p150 = por %p148, %p149
      %p151 = scmp.ne.s32.totalorder %s140, %s143
      %p152 = scmp.eq.s32.totalorder %s36, 1
      %p153 = por %p151, %p152
      %p154 = scmp.ne.s32.totalorder %s143, %s144
      %p155 = scmp.eq.s32.totalorder %s36, 0
      %p156 = por %p154, %p155
      %p157 = scmp.ne.s32.totalorder %s143, %s144
      %p158 = scmp.eq.s32.totalorder %s37, 1
      %p159 = por %p157, %p158
      %p161 = scmp.ne.s32.totalorder %s144, %s160
      %p162 = scmp.eq.s32.totalorder %s37, 0
      %p163 = por %p161, %p162
      %s164 = ssub.s32 %s31, %s38
      %p165 = scmp.eq.s32.totalorder %s164, 0
      %s167 = sadd.s32 %s166, 1
      %s168 = scalar_select %p165, %s166, %s167
      %p171 = pneg %p165
      %p172 = scmp.eq.s32.totalorder %s31, 1
      %p173 = por %p171, %p172
      %p174 = scmp.ne.s32.totalorder %s166, %s169
      %p175 = scmp.eq.s32.totalorder %s31, 0
      %p176 = por %p174, %p175
      %p177 = scmp.ne.s32.totalorder %s166, %s169
      %p178 = scmp.eq.s32.totalorder %s36, 1
      %p179 = por %p177, %p178
      %p180 = scmp.ne.s32.totalorder %s169, %s170
      %p181 = scmp.eq.s32.totalorder %s36, 0
      %p182 = por %p180, %p181
      %p183 = scmp.ne.s32.totalorder %s169, %s170
      %p184 = scmp.eq.s32.totalorder %s37, 1
      %p185 = por %p183, %p184
      %p187 = scmp.ne.s32.totalorder %s170, %s186
      %p188 = scmp.eq.s32.totalorder %s37, 0
      %p189 = por %p187, %p188
      %s190 = ssub.s32 %s31, %s38
      %p191 = scmp.eq.s32.totalorder %s190, 0
      %s193 = sadd.s32 %s192, 1
      %s194 = scalar_select %p191, %s192, %s193
      %p197 = pneg %p191
      %p198 = scmp.eq.s32.totalorder %s31, 1
      %p199 = por %p197, %p198
      %p200 = scmp.ne.s32.totalorder %s192, %s195
      %p201 = scmp.eq.s32.totalorder %s31, 0
      %p202 = por %p200, %p201
      %p203 = scmp.ne.s32.totalorder %s192, %s195
      %p204 = scmp.eq.s32.totalorder %s36, 1
      %p205 = por %p203, %p204
      %p206 = scmp.ne.s32.totalorder %s195, %s196
      %p207 = scmp.eq.s32.totalorder %s36, 0
      %p208 = por %p206, %p207
      %p209 = scmp.ne.s32.totalorder %s195, %s196
      %p210 = scmp.eq.s32.totalorder %s37, 1
      %p211 = por %p209, %p210
      %p213 = scmp.ne.s32.totalorder %s196, %s212
      %p214 = scmp.eq.s32.totalorder %s37, 0
      %p215 = por %p213, %p214
      %s216 = ssub.s32 %s31, %s38
      %p217 = scmp.eq.s32.totalorder %s216, 0
      %s219 = sadd.s32 %s218, 1
      %s220 = scalar_select %p217, %s218, %s219
      %p223 = pneg %p217
      %p224 = scmp.eq.s32.totalorder %s31, 1
      %p225 = por %p223, %p224
      %p226 = scmp.ne.s32.totalorder %s218, %s221
      %p227 = scmp.eq.s32.totalorder %s31, 0
      %p228 = por %p226, %p227
      %p229 = scmp.ne.s32.totalorder %s218, %s221
      %p230 = scmp.eq.s32.totalorder %s36, 1
      %p231 = por %p229, %p230
      %p232 = scmp.ne.s32.totalorder %s221, %s222
      %p233 = scmp.eq.s32.totalorder %s36, 0
      %p234 = por %p232, %p233
      %p235 = scmp.ne.s32.totalorder %s221, %s222
      %p236 = scmp.eq.s32.totalorder %s37, 1
      %p237 = por %p235, %p236
      %p239 = scmp.ne.s32.totalorder %s222, %s238
      %p240 = scmp.eq.s32.totalorder %s37, 0
      %p241 = por %p239, %p240
      %s242 = ssub.s32 %s31, %s38
      %p243 = scmp.eq.s32.totalorder %s242, 0
      %s245 = sadd.s32 %s244, 1
      %s246 = scalar_select %p243, %s244, %s245
      %p249 = pneg %p243
      %p250 = scmp.eq.s32.totalorder %s31, 1
      %p251 = por %p249, %p250
      %p252 = scmp.ne.s32.totalorder %s244, %s247
      %p253 = scmp.eq.s32.totalorder %s31, 0
      %p254 = por %p252, %p253
      %p255 = scmp.ne.s32.totalorder %s244, %s247
      %p256 = scmp.eq.s32.totalorder %s36, 1
      %p257 = por %p255, %p256
      %p258 = scmp.ne.s32.totalorder %s247, %s248
      %p259 = scmp.eq.s32.totalorder %s36, 0
      %p260 = por %p258, %p259
      %p261 = scmp.ne.s32.totalorder %s247, %s248
      %p262 = scmp.eq.s32.totalorder %s37, 1
      %p263 = por %p261, %p262
      %p265 = scmp.ne.s32.totalorder %s248, %s264
      %p266 = scmp.eq.s32.totalorder %s37, 0
      %p267 = por %p265, %p266
      %s268 = ssub.s32 %s31, %s38
      %p269 = scmp.eq.s32.totalorder %s268, 0
      %s271 = sadd.s32 %s270, 1
      %s272 = scalar_select %p269, %s270, %s271
      %p275 = pneg %p269
      %p276 = scmp.eq.s32.totalorder %s31, 1
      %p277 = por %p275, %p276
      %p278 = scmp.ne.s32.totalorder %s270, %s273
      %p279 = scmp.eq.s32.totalorder %s31, 0
      %p280 = por %p278, %p279
      %p281 = scmp.ne.s32.totalorder %s270, %s273
      %p282 = scmp.eq.s32.totalorder %s36, 1
      %p283 = por %p281, %p282
      %p284 = scmp.ne.s32.totalorder %s273, %s274
      %p285 = scmp.eq.s32.totalorder %s36, 0
      %p286 = por %p284, %p285
      %p287 = scmp.ne.s32.totalorder %s273, %s274
      %p288 = scmp.eq.s32.totalorder %s37, 1
      %p289 = por %p287, %p288
      %p291 = scmp.ne.s32.totalorder %s274, %s290
      %p292 = scmp.eq.s32.totalorder %s37, 0
      %p293 = por %p291, %p292
      %s294 = ssub.s32 %s31, %s38
      %p295 = scmp.eq.s32.totalorder %s294, 0
      %s297 = sadd.s32 %s296, 1
      %s298 = scalar_select %p295, %s296, %s297
      %p301 = pneg %p295
      %p302 = scmp.eq.s32.totalorder %s31, 1
      %p303 = por %p301, %p302
      %p304 = scmp.ne.s32.totalorder %s296, %s299
      %p305 = scmp.eq.s32.totalorder %s31, 0
      %p306 = por %p304, %p305
      %p307 = scmp.ne.s32.totalorder %s296, %s299
      %p308 = scmp.eq.s32.totalorder %s36, 1
      %p309 = por %p307, %p308
      %p310 = scmp.ne.s32.totalorder %s299, %s300
      %p311 = scmp.eq.s32.totalorder %s36, 0
      %p312 = por %p310, %p311
      %p313 = scmp.ne.s32.totalorder %s299, %s300
      %p314 = scmp.eq.s32.totalorder %s37, 1
      %p315 = por %p313, %p314
      %p317 = scmp.ne.s32.totalorder %s300, %s316
      %p318 = scmp.eq.s32.totalorder %s37, 0
      %p319 = por %p317, %p318
      %s320 = ssub.s32 %s31, %s38
      %p321 = scmp.eq.s32.totalorder %s320, 0
      %s323 = sadd.s32 %s322, 1
      %s324 = scalar_select %p321, %s322, %s323
      %p327 = pneg %p321
      %p328 = scmp.eq.s32.totalorder %s31, 1
      %p329 = por %p327, %p328
      %p330 = scmp.ne.s32.totalorder %s322, %s325
      %p331 = scmp.eq.s32.totalorder %s31, 0
      %p332 = por %p330, %p331
      %p333 = scmp.ne.s32.totalorder %s322, %s325
      %p334 = scmp.eq.s32.totalorder %s36, 1
      %p335 = por %p333, %p334
      %p336 = scmp.ne.s32.totalorder %s325, %s326
      %p337 = scmp.eq.s32.totalorder %s36, 0
      %p338 = por %p336, %p337
      %p339 = scmp.ne.s32.totalorder %s325, %s326
      %p340 = scmp.eq.s32.totalorder %s37, 1
      %p341 = por %p339, %p340
      %p343 = scmp.ne.s32.totalorder %s326, %s342
      %p344 = scmp.eq.s32.totalorder %s37, 0
      %p345 = por %p343, %p344
      %s346 = ssub.s32 %s31, %s38
      %p347 = scmp.eq.s32.totalorder %s346, 0
      %s349 = sadd.s32 %s348, 1
      %s350 = scalar_select %p347, %s348, %s349
      %p353 = pneg %p347
      %p354 = scmp.eq.s32.totalorder %s31, 1
      %p355 = por %p353, %p354
      %p356 = scmp.ne.s32.totalorder %s348, %s351
      %p357 = scmp.eq.s32.totalorder %s31, 0
      %p358 = por %p356, %p357
      %p359 = scmp.ne.s32.totalorder %s348, %s351
      %p360 = scmp.eq.s32.totalorder %s36, 1
      %p361 = por %p359, %p360
      %p362 = scmp.ne.s32.totalorder %s351, %s352
      %p363 = scmp.eq.s32.totalorder %s36, 0
      %p364 = por %p362, %p363
      %p365 = scmp.ne.s32.totalorder %s351, %s352
      %p366 = scmp.eq.s32.totalorder %s37, 1
      %p367 = por %p365, %p366
      %p369 = scmp.ne.s32.totalorder %s352, %s368
      %p370 = scmp.eq.s32.totalorder %s37, 0
      %p371 = por %p369, %p370
      %p372 = scmp.le.s32.totalorder 1, %s31
      %p373 = scmp.lt.s32.totalorder %s31, 3
      %p374 = pnand %p372, %p373
      %p375 = pneg %p374
      // Predicated region
      $region9: #{tpu_custom_call.1} parent=5 // pred_check
        _
      $region10: #{tpu_custom_call.1} parent=5 // pred_check_branch
        %377 = sbr.rel (%p374) target = $region12
      $region11: #{tpu_custom_call.1} parent=5 // pred_region
        %s378 = ssub.s32 %s31, 1
        // Predicated region
        $region13: #{tpu_custom_call.1} parent=11 // pred_check
          %p379 = pneg %p104
        $region14: #{tpu_custom_call.1} parent=11 // pred_check_branch
          %381 = sbr.rel (%p379) target = $region16
        $region15: #{tpu_custom_call.1} parent=11 // pred_region
          _
        $region16: #{tpu_custom_call.1} parent=11 // pred_fallthru
          _
      $region12: #{tpu_custom_call.1} parent=5 // pred_fallthru
        _
      %p382 = scmp.lt.s32.totalorder %s31, 2
      // Predicated region
      $region17: #{tpu_custom_call.1} parent=5 // pred_check
        %p383 = pneg %p382
      $region18: #{tpu_custom_call.1} parent=5 // pred_check_branch
        %385 = sbr.rel (%p383) target = $region20
      $region19: #{tpu_custom_call.1} parent=5 // pred_region
        // Predicated region
        $region21: #{tpu_custom_call.1} parent=19 // pred_check
          %p386 = pneg %p51
        $region22: #{tpu_custom_call.1} parent=19 // pred_check_branch
          %388 = sbr.rel (%p386) target = $region24
        $region23: #{tpu_custom_call.1} parent=19 // pred_region
          %p389 = scmp.lt.s32.totalorder %s31, 1
          %s390 = scalar_select %p389, %s31, 1
          %s391 = smul.addr %s390, 2
          %s392 = smul.addr %s391, 8
          %s393 = scalar_lea.vmem %s0, %s392
        $region24: #{tpu_custom_call.1} parent=19 // pred_fallthru
          _
        // Predicated region
        $region25: #{tpu_custom_call.1} parent=19 // pred_check
          %p394 = pneg %p77
        $region26: #{tpu_custom_call.1} parent=19 // pred_check_branch
          %396 = sbr.rel (%p394) target = $region28
        $region27: #{tpu_custom_call.1} parent=19 // pred_region
          %p397 = scmp.lt.s32.totalorder %s31, 1
          %s398 = scalar_select %p397, %s31, 1
          %s399 = smul.addr %s398, 4
          %s400 = scalar_lea.vmem %s1, %s399
        $region28: #{tpu_custom_call.1} parent=19 // pred_fallthru
          _
        // Predicated region
        $region29: #{tpu_custom_call.1} parent=19 // pred_check
          %p401 = pneg %p124
        $region30: #{tpu_custom_call.1} parent=19 // pred_check_branch
          %403 = sbr.rel (%p401) target = $region32
        $region31: #{tpu_custom_call.1} parent=19 // pred_region
          %p404 = scmp.lt.s32.totalorder %s31, 1
          %s405 = scalar_select %p404, %s31, 1
          %s406 = smul.addr %s405, 8
          %s407 = scalar_lea.vmem %s3, %s406
        $region32: #{tpu_custom_call.1} parent=19 // pred_fallthru
          _
        // Predicated region
        $region33: #{tpu_custom_call.1} parent=19 // pred_check
          %p408 = pneg %p150
        $region34: #{tpu_custom_call.1} parent=19 // pred_check_branch
          %410 = sbr.rel (%p408) target = $region36
        $region35: #{tpu_custom_call.1} parent=19 // pred_region
          %s411 = sand.u32 %s140, 1
          %s412 = scalar_lea.sflag [#allocation3], %s411
          %s413 = sand.u32 %s140, 1
          %s414 = scalar_lea.vmem [#allocation2], %s413
          %416 = vsyncadd %s412, 0
          %s417 = scalar_lea.hbm %s4, %s31
          %s419 = sshll.u32 %s417, 4
          %s420 = int_to_ptr.hbm [resolvable:$true] %s419
          %s421 = sshll.u32 %s414, 4
          %s422 = int_to_ptr.vmem [resolvable:$true] %s421
          %424 = dma.hbm_to_vmem [thread:$0]  %s420, 16, %s422, %s412
        $region36: #{tpu_custom_call.1} parent=19 // pred_fallthru
          _
        // Predicated region
        $region37: #{tpu_custom_call.1} parent=19 // pred_check
          %p425 = pneg %p176
        $region38: #{tpu_custom_call.1} parent=19 // pred_check_branch
          %427 = sbr.rel (%p425) target = $region40
        $region39: #{tpu_custom_call.1} parent=19 // pred_region
          %p428 = scmp.lt.s32.totalorder %s31, 1
          %s429 = scalar_select %p428, %s31, 1
          %s430 = smul.addr %s429, 8
          %s431 = scalar_lea.vmem %s5, %s430
        $region40: #{tpu_custom_call.1} parent=19 // pred_fallthru
          _
        // Predicated region
        $region41: #{tpu_custom_call.1} parent=19 // pred_check
          %p432 = pneg %p202
        $region42: #{tpu_custom_call.1} parent=19 // pred_check_branch
          %434 = sbr.rel (%p432) target = $region44
        $region43: #{tpu_custom_call.1} parent=19 // pred_region
          %p435 = scmp.lt.s32.totalorder %s31, 1
          %s436 = scalar_select %p435, %s31, 1
          %s437 = smul.addr %s436, 4
          %s438 = scalar_lea.vmem %s6, %s437
        $region44: #{tpu_custom_call.1} parent=19 // pred_fallthru
          _
        // Predicated region
        $region45: #{tpu_custom_call.1} parent=19 // pred_check
          %p439 = pneg %p228
        $region46: #{tpu_custom_call.1} parent=19 // pred_check_branch
          %441 = sbr.rel (%p439) target = $region48
        $region47: #{tpu_custom_call.1} parent=19 // pred_region
          %p442 = scmp.lt.s32.totalorder %s31, 1
          %s443 = scalar_select %p442, %s31, 1
          %s444 = smul.addr %s443, 8
          %s445 = scalar_lea.vmem %s7, %s444
        $region48: #{tpu_custom_call.1} parent=19 // pred_fallthru
          _
      $region20: #{tpu_custom_call.1} parent=5 // pred_fallthru
        _
      %p446 = scmp.le.s32.totalorder 1, %s31
      %p447 = scmp.lt.s32.totalorder %s31, 3
      %p448 = pnand %p446, %p447
      %p449 = pneg %p448
      // Predicated region
      $region49: #{tpu_custom_call.1} parent=5 // pred_check
        _
      $region50: #{tpu_custom_call.1} parent=5 // pred_check_branch
        %451 = sbr.rel (%p448) target = $region52
      $region51: #{tpu_custom_call.1} parent=5 // pred_region
        %s452 = ssub.s32 %s31, 1
        %s453 = sand.u32 %s143, 1
        %s454 = scalar_lea.sflag [#allocation3], %s453
        %s455 = sand.u32 %s143, 1
        %s456 = scalar_lea.vmem [#allocation2], %s455
        // Predicated region
        $region53: #{tpu_custom_call.1} parent=51 // pred_check
          %p457 = pneg %p156
        $region54: #{tpu_custom_call.1} parent=51 // pred_check_branch
          %459 = sbr.rel (%p457) target = $region56
        $region55: #{tpu_custom_call.1} parent=51 // pred_region
          %461 = dma.done %s454, 16
        $region56: #{tpu_custom_call.1} parent=51 // pred_fallthru
          _
        %p462 = scmp.lt.s32.totalorder %s36, 1
        %s463 = scalar_select %p462, %s36, 1
        %s464 = smul.addr %s463, 2
        %s465 = smul.addr %s464, 8
        %s466 = scalar_lea.vmem %s0, %s465
        %p467 = pneg %p57
        %p468 = pneg %p54
        %p469 = scmp.lt.s32.totalorder %s36, 1
        %s470 = scalar_select %p469, %s36, 1
        %s471 = smul.addr %s470, 4
        %s472 = scalar_lea.vmem %s1, %s471
        %p473 = pneg %p83
        %p474 = pneg %p80
        %p475 = pneg %p104
        %p476 = pneg %p101
        %p477 = scmp.lt.s32.totalorder %s36, 1
        %s478 = scalar_select %p477, %s36, 1
        %s479 = smul.addr %s478, 8
        %s480 = scalar_lea.vmem %s3, %s479
        %p481 = pneg %p130
        %p482 = pneg %p127
        %s483 = sand.u32 %s143, 1
        %s484 = scalar_lea.sflag [#allocation3], %s483
        %s485 = sand.u32 %s143, 1
        %s486 = scalar_lea.vmem [#allocation2], %s485
        %p487 = pneg %p156
        %p488 = pneg %p153
        %p489 = scmp.lt.s32.totalorder %s36, 1
        %s490 = scalar_select %p489, %s36, 1
        %s491 = smul.addr %s490, 8
        %s492 = scalar_lea.vmem %s5, %s491
        %p493 = pneg %p182
        %p494 = pneg %p179
        %p495 = scmp.lt.s32.totalorder %s36, 1
        %s496 = scalar_select %p495, %s36, 1
        %s497 = smul.addr %s496, 4
        %s498 = scalar_lea.vmem %s6, %s497
        %p499 = pneg %p208
        %p500 = pneg %p205
        %p501 = scmp.lt.s32.totalorder %s36, 1
        %s502 = scalar_select %p501, %s36, 1
        %s503 = smul.addr %s502, 8
        %s504 = scalar_lea.vmem %s7, %s503
        %p505 = pneg %p234
        %p506 = pneg %p231
        %p507 = pneg %p260
        %p508 = pneg %p257
        %s509 = sand.u32 %s247, 1
        %s510 = scalar_lea.sflag [#allocation4], %s509
        %s511 = sand.u32 %s247, 1
        %s512 = scalar_lea.vmem [#allocation5], %s511
        %p513 = pneg %p286
        %p514 = pneg %p283
        %s515 = sand.u32 %s36, 1
        %s516 = scalar_lea.sflag [#allocation7], %s515
        %s517 = sand.u32 %s273, 1
        %s518 = smul.addr %s517, 4
        %s519 = scalar_lea.vmem [#allocation6], %s518
        %p520 = pneg %p312
        %p521 = pneg %p309
        %s522 = sand.u32 %s36, 1
        %s523 = scalar_lea.sflag [#allocation7], %s522
        %s524 = sand.u32 %s299, 1
        %s525 = smul.addr %s524, 16
        %s526 = scalar_lea.vmem [#allocation8], %s525
        %p527 = pneg %p338
        %p528 = pneg %p335
        %s529 = sand.u32 %s36, 1
        %s530 = scalar_lea.sflag [#allocation10], %s529
        %s531 = sand.u32 %s325, 1
        %s532 = scalar_lea.vmem [#allocation9], %s531
        %p533 = pneg %p364
        %p534 = pneg %p361
        %s535 = sand.u32 %s36, 1
        %s536 = scalar_lea.sflag [#allocation10], %s535
        %s537 = sand.u32 %s351, 1
        %s538 = scalar_lea.vmem [#allocation11], %s537
        %p539 = scmp.lt.s32.totalorder %s36, 1
        %s540 = scalar_select %p539, %s36, 1
        %s541 = smul.addr %s540, 2
        %s542 = smul.addr %s541, 8
        %s543 = scalar_lea.vmem %s0, %s542
        %p544 = scmp.lt.s32.totalorder %s36, 1
        %s545 = scalar_select %p544, %s36, 1
        %s546 = smul.addr %s545, 4
        %s547 = scalar_lea.vmem %s1, %s546
        %p548 = scmp.lt.s32.totalorder %s36, 1
        %s549 = scalar_select %p548, %s36, 1
        %s550 = smul.addr %s549, 8
        %s551 = scalar_lea.vmem %s3, %s550
        %p552 = scmp.lt.s32.totalorder %s36, 1
        %s553 = scalar_select %p552, %s36, 1
        %s554 = smul.addr %s553, 8
        %s555 = scalar_lea.vmem %s5, %s554
        %p556 = scmp.lt.s32.totalorder %s36, 1
        %s557 = scalar_select %p556, %s36, 1
        %s558 = smul.addr %s557, 4
        %s559 = scalar_lea.vmem %s6, %s558
        %p560 = scmp.lt.s32.totalorder %s36, 1
        %s561 = scalar_select %p560, %s36, 1
        %s562 = smul.addr %s561, 8
        %s563 = scalar_lea.vmem %s7, %s562
        %v564 = vld [vmem:[%s543] sm:$0xff]
        %v565 = vld [vmem:[%s543 + $0x8] sm:$0xff]
        %v566 = vld [vmem:[%s547] sm:$0xf]
        %v567 = vld [vmem:[%s2] sm:$0x3]
        %v568 = vld [vmem:[%s551] sm:$0xff]
        %vm569 = vcmp.gt.s32.totalorder %v568, 0
        %v570 = vsel %vm569, %v568, 0
        %v571 = vld [vmem:[%s456] sm:$0x1]
        %vm572 = vcmp.gt.s32.totalorder %v571, 0
        %v573 = vsel %vm572, %v571, 0
        %v574 = vld [vmem:[%s555] sm:$0xff]
        %v575 = vld [vmem:[%s559] sm:$0xf]
        %v576 = vld [vmem:[%s563] sm:$0xff]
        %v577 = vperm.slane %v567, 0
        %579 = vset.pattern.permute.xlu0 0
        %580 = vperm.xlu0 %579, %v574
        %v581 = vpop.permute.xlu0 %580
        %v583 = vsub.f32 %v577, %v581
        %v584 = vperm.slane %v567, 1
        %585 = vset.pattern.permute.xlu0 1
        %586 = vperm.xlu0 %585, %v574
        %v587 = vpop.permute.xlu0 %586
        %v589 = vsub.f32 %v584, %v587
        %v590 = vmin.f32 %v583, %v589
        %591 = vset.pattern.permute.xlu0 2
        %592 = vperm.xlu0 %591, %v574
        %v593 = vpop.permute.xlu0 %592
        %v595 = vsub.f32 %v593, %v577
        %596 = vset.pattern.permute.xlu0 3
        %597 = vperm.xlu0 %596, %v574
        %v598 = vpop.permute.xlu0 %597
        %v600 = vsub.f32 %v598, %v584
        %v601 = vmin.f32 %v595, %v600
        %v602 = vmin.f32 %v590, %v601
        %vm603 = vcmp.gt.f32.partialorder %v602, 1e-09
        %vm604 = vcmp.gt.f32.partialorder %v576, 0.0
        %v605 = vsel %vm604, 1, 0
        %606 = vset.pattern.permute.xlu0 0
        %607 = vperm.xlu0 %606, %v605
        %v608 = vpop.permute.xlu0 %607
        %vm609 = vcmp.eq.s32.totalorder %v608, 1
        %vm610 = vmand %vm603, %vm609
        %v611 = vsel %vm610, 1, 0
        %v612 = vcvt.s32.f32 %v611
        %v613 = vlaneseq
        %v614 = vand.u32 %v613, 127
        %615 = vset.pattern.permute.xlu0 0
        %616 = vperm.xlu0 %615, %v570
        %v617 = vpop.permute.xlu0 %616
        %vm618 = vcmp.eq.s32.totalorder %v614, %v617
        %v619 = vsel %vm618, 1, 0
        %v620 = vcvt.s32.f32 %v619
        %vm621 = vcmask 130048
        %v623 = vsel %vm621, %v620, 0
        %625 = vmatpush.msra.mxu0 0.0
        %626 = vmatpush.msra.mxu0 0.0
        %627 = vmatpush.msra.mxu0 0.0
        %628 = vmatpush.msra.mxu0 0.0
        %629 = vmatpush.msra.mxu0 0.0
        %630 = vmatpush.msra.mxu0 0.0
        %631 = vmatpush.msra.mxu0 0.0
        %632 = vmatpush.msra.mxu0 0.0
        %633 = vmatpush.msra.mxu0 0.0
        %634 = vmatpush.msra.mxu0 0.0
        %635 = vmatpush.msra.mxu0 0.0
        %636 = vmatpush.msra.mxu0 0.0
        %637 = vmatpush.msra.mxu0 0.0
        %638 = vmatpush.msra.mxu0 0.0
        %639 = vmatpush.msra.mxu0 %v565
        %640 = vmatpush.msra.mxu0 %v564
        %641 = vmatmul.f32.gmra.mxu0 %v623
        %v642 = vpop.f32.mrf.mxu0
        %v643 = vadd.f32 0.0, %v642
        %644 = vdwg.mxu0
        %v645 = vsel %vm610, %v643, 0.0
        %646 = vrot.lane.b32.xlu0 %v574, 2
        %v647 = vpop.permute.xlu0 %646
        %v649 = vsub.f32 %v574, %v647
        %v650 = vadd.f32 %v649, 1e-07
        %v652 = vrot.slane %v566, 6
        %v654 = vsub.f32 %v566, %v652
        %v655 = vadd.f32 %v654, 1e-07
        %v656 = vperm.slane %v566, 2
        %v657 = vmin.f32 %v593, %v656
        %v658 = vperm.slane %v566, 0
        %v659 = vmax.f32 %v581, %v658
        %v660 = vsub.f32 %v657, %v659
        %v661 = vmax.f32 %v660, 0.0
        %v662 = vperm.slane %v566, 3
        %v663 = vmin.f32 %v598, %v662
        %v664 = vperm.slane %v566, 1
        %v665 = vmax.f32 %v587, %v664
        %v666 = vsub.f32 %v663, %v665
        %v667 = vmax.f32 %v666, 0.0
        %v668 = vmul.f32 %v661, %v667
        %670 = vrot.lane.b32.xlu0 %v650, 127
        %v671 = vpop.permute.xlu0 %670
        %v673 = vmul.f32 %v649, %v671
        %v675 = vrot.slane %v655, 1
        %v677 = vmul.f32 %v654, %v675
        %679 = vset.pattern.permute.xlu0 2
        %680 = vperm.xlu0 %679, %v673
        %v681 = vpop.permute.xlu0 %680
        %v683 = vperm.slane %v677, 2
        %v684 = vadd.f32 %v681, %v683
        %v685 = vsub.f32 %v684, %v668
        %v686 = vadd.f32 %v685, 1e-07
        %v687 = vrcp.pop %v686
        %v688 = vmul.f32 %v668, %v687
        %v689 = vmin.f32 %v688, 1.0
        %v690 = vmax.f32 %v593, %v656
        %v691 = vmin.f32 %v581, %v658
        %v692 = vsub.f32 %v690, %v691
        %v693 = vmax.f32 %v598, %v662
        %v694 = vmin.f32 %v587, %v664
        %v695 = vsub.f32 %v693, %v694
        %v696 = vmul.f32 %v692, %v692
        %v697 = vmul.f32 %v695, %v695
        %v698 = vadd.f32 %v696, %v697
        %v699 = vadd.f32 %v698, 1e-07
        %v700 = vrcp.pop %v699
        %v701 = vrot.slane %v566, 2
        %v703 = vadd.f32 %v566, %v701
        %v704 = vperm.slane %v703, 0
        %v705 = vsub.f32 %v704, %v581
        %v706 = vsub.f32 %v705, %v593
        %v707 = vmul.f32 %v706, %v706
        %v708 = vperm.slane %v703, 1
        %v709 = vsub.f32 %v708, %v587
        %v710 = vsub.f32 %v709, %v598
        %v711 = vmul.f32 %v710, %v710
        %v712 = vadd.f32 %v707, %v711
        %v713 = vmul.f32 %v712, 0.25
        %v714 = vrcp.pop %v655
        %v716 = vrot.slane %v714, 1
        %v718 = vmul.f32 %v654, %v716
        %vm719 = vcmp.lt.f32.partialorder %v718, 0.0
        %v720 = vsel %vm719, -1.0, 1.0
        %v721 = vand.u32 2147483647, %v718
        %vm722 = vcmp.gt.f32.partialorder %v721, 2.4142137
        %vm723 = vcmp.gt.f32.partialorder %v721, 0.41421357
        %vm724 = vmxor %vm722, 1
        %vm725 = vmand %vm723, %vm724
        %v726 = vsel %vm725, 0.7853982, 0.0
        %v727 = vsel %vm722, 1.5707964, %v726
        %v728 = vadd.f32 %v721, 1e-30
        %v729 = vrcp.pop %v728
        %v730 = vsub.f32 0.0, %v729
        %v731 = vsub.f32 %v721, 1.0
        %v732 = vadd.f32 %v721, 1.0
        %v733 = vrcp.pop %v732
        %v734 = vmul.f32 %v731, %v733
        %v735 = vsel %vm725, %v734, %v721
        %v736 = vsel %vm722, %v730, %v735
        %v737 = vmul.f32 %v736, %v736
        %v738 = vmul.f32 %v737, 0.080537446
        %v739 = vsub.f32 %v738, 0.13877685
        %v740 = vmul.f32 %v739, %v737
        %v741 = vadd.f32 %v740, 0.19977711
        %v742 = vmul.f32 %v741, %v737
        %v743 = vsub.f32 %v742, 0.3333295
        %v744 = vmul.f32 %v743, %v737
        %v745 = vmul.f32 %v744, %v736
        %v746 = vadd.f32 %v745, %v736
        %v747 = vadd.f32 %v746, %v727
        %v748 = vmul.f32 %v720, %v747
        %v749 = vrcp.pop %v650
        %751 = vrot.lane.b32.xlu0 %v749, 127
        %v752 = vpop.permute.xlu0 %751
        %v754 = vmul.f32 %v649, %v752
        %vm755 = vcmp.lt.f32.partialorder %v754, 0.0
        %v756 = vsel %vm755, -1.0, 1.0
        %v757 = vand.u32 2147483647, %v754
        %vm758 = vcmp.gt.f32.partialorder %v757, 2.4142137
        %vm759 = vcmp.gt.f32.partialorder %v757, 0.41421357
        %vm760 = vmxor %vm758, 1
        %vm761 = vmand %vm759, %vm760
        %v762 = vsel %vm761, 0.7853982, 0.0
        %v763 = vsel %vm758, 1.5707964, %v762
        %v764 = vadd.f32 %v757, 1e-30
        %v765 = vrcp.pop %v764
        %v766 = vsub.f32 0.0, %v765
        %v767 = vsub.f32 %v757, 1.0
        %v768 = vadd.f32 %v757, 1.0
        %v769 = vrcp.pop %v768
        %v770 = vmul.f32 %v767, %v769
        %v771 = vsel %vm761, %v770, %v757
        %v772 = vsel %vm758, %v766, %v771
        %v773 = vmul.f32 %v772, %v772
        %v774 = vmul.f32 %v773, 0.080537446
        %v775 = vsub.f32 %v774, 0.13877685
        %v776 = vmul.f32 %v775, %v773
        %v777 = vadd.f32 %v776, 0.19977711
        %v778 = vmul.f32 %v777, %v773
        %v779 = vsub.f32 %v778, 0.3333295
        %v780 = vmul.f32 %v779, %v773
        %v781 = vmul.f32 %v780, %v772
        %v782 = vadd.f32 %v781, %v772
        %v783 = vadd.f32 %v782, %v763
        %v784 = vmul.f32 %v756, %v783
        %v785 = vperm.slane %v748, 2
        %787 = vset.pattern.permute.xlu0 2
        %788 = vperm.xlu0 %787, %v784
        %v789 = vpop.permute.xlu0 %788
        %v791 = vsub.f32 %v785, %v789
        %v792 = vmul.f32 %v791, %v791
        %v793 = vmul.f32 %v792, 0.40528473
        %v794 = vsub.f32 %v793, %v689
        %v795 = vadd.f32 %v794, 1.0000001
        %v796 = vrcp.pop %v795
        %v797 = vmul.f32 %v793, %v796
        %v798 = vmul.f32 %v713, %v700
        %v799 = vmul.f32 %v793, %v797
        %v800 = vadd.f32 %v798, %v799
        %v801 = vsub.f32 %v689, %v800
        %v802 = vmax.f32 %v801, 0.0
        %v803 = vsel %vm610, %v802, 0.0
        %v804 = vmul.f32 %v803, %v803
        %v805 = vmul.f32 %v804, %v804
        %v806 = vmul.f32 %v804, %v805
        %v807 = vmul.f32 %v645, %v806
        %808 = vmax.xlane.f32.xlu0 %v807
        %v809 = vpop.xlane.xlu0 %808
        %vm810 = vcmp.eq.f32.partialorder %v807, %v809
        %v811 = vsel %vm810, %v614, 128
        %v812 = vand.u32 %v811, 65535
        %v813 = vshra.s32 %v811, 16
        %v814 = vcvt.s32.f32 %v812
        %v815 = vcvt.s32.f32 %v813
        %816 = vmin.xlane.f32.xlu0 %v815
        %v817 = vpop.xlane.xlu0 %816
        %vm818 = vcmp.eq.f32.partialorder %v815, %v817
        %v819 = vsel %vm818, %v814, inf
        %820 = vmin.xlane.f32.xlu0 %v819
        %v821 = vpop.xlane.xlu0 %820
        %v822 = vcvt.f32.s32 %v821
        %v823 = vcvt.f32.s32 %v817
        %v824 = vshll.u32 %v823, 16
        %v825 = vadd.s32 %v824, %v822
        %vm826 = vcmp.eq.s32.totalorder %v614, %v825
        %v827 = vsel %vm826, 1, 0
        %v828 = vcvt.s32.f32 %v827
        %v829 = vadd.f32 %v828, 0.0
        %v830 = vsel %vm826, -1.0, %v807
        %831 = vmax.xlane.f32.xlu0 %v830
        %v832 = vpop.xlane.xlu0 %831
        %vm833 = vcmp.eq.f32.partialorder %v830, %v832
        %v834 = vsel %vm833, %v614, 128
        %v835 = vand.u32 %v834, 65535
        %v836 = vshra.s32 %v834, 16
        %v837 = vcvt.s32.f32 %v835
        %v838 = vcvt.s32.f32 %v836
        %839 = vmin.xlane.f32.xlu0 %v838
        %v840 = vpop.xlane.xlu0 %839
        %vm841 = vcmp.eq.f32.partialorder %v838, %v840
        %v842 = vsel %vm841, %v837, inf
        %843 = vmin.xlane.f32.xlu0 %v842
        %v844 = vpop.xlane.xlu0 %843
        %v845 = vcvt.f32.s32 %v844
        %v846 = vcvt.f32.s32 %v840
        %v847 = vshll.u32 %v846, 16
        %v848 = vadd.s32 %v847, %v845
        %vm849 = vcmp.eq.s32.totalorder %v614, %v848
        %v850 = vsel %vm849, 1, 0
        %v851 = vcvt.s32.f32 %v850
        %v852 = vadd.f32 %v829, %v851
        %v853 = vsel %vm849, -1.0, %v830
        %854 = vmax.xlane.f32.xlu0 %v853
        %v855 = vpop.xlane.xlu0 %854
        %vm856 = vcmp.eq.f32.partialorder %v853, %v855
        %v857 = vsel %vm856, %v614, 128
        %v858 = vand.u32 %v857, 65535
        %v859 = vshra.s32 %v857, 16
        %v860 = vcvt.s32.f32 %v858
        %v861 = vcvt.s32.f32 %v859
        %862 = vmin.xlane.f32.xlu0 %v861
        %v863 = vpop.xlane.xlu0 %862
        %vm864 = vcmp.eq.f32.partialorder %v861, %v863
        %v865 = vsel %vm864, %v860, inf
        %866 = vmin.xlane.f32.xlu0 %v865
        %v867 = vpop.xlane.xlu0 %866
        %v868 = vcvt.f32.s32 %v867
        %v869 = vcvt.f32.s32 %v863
        %v870 = vshll.u32 %v869, 16
        %v871 = vadd.s32 %v870, %v868
        %vm872 = vcmp.eq.s32.totalorder %v614, %v871
        %v873 = vsel %vm872, 1, 0
        %v874 = vcvt.s32.f32 %v873
        %v875 = vadd.f32 %v852, %v874
        %v876 = vsel %vm872, -1.0, %v853
        %877 = vmax.xlane.f32.xlu0 %v876
        %v878 = vpop.xlane.xlu0 %877
        %vm879 = vcmp.eq.f32.partialorder %v876, %v878
        %v880 = vsel %vm879, %v614, 128
        %v881 = vand.u32 %v880, 65535
        %v882 = vshra.s32 %v880, 16
        %v883 = vcvt.s32.f32 %v881
        %v884 = vcvt.s32.f32 %v882
        %885 = vmin.xlane.f32.xlu0 %v884
        %v886 = vpop.xlane.xlu0 %885
        %vm887 = vcmp.eq.f32.partialorder %v884, %v886
        %v888 = vsel %vm887, %v883, inf
        %889 = vmin.xlane.f32.xlu0 %v888
        %v890 = vpop.xlane.xlu0 %889
        %v891 = vcvt.f32.s32 %v890
        %v892 = vcvt.f32.s32 %v886
        %v893 = vshll.u32 %v892, 16
        %v894 = vadd.s32 %v893, %v891
        %vm895 = vcmp.eq.s32.totalorder %v614, %v894
        %v896 = vsel %vm895, 1, 0
        %v897 = vcvt.s32.f32 %v896
        %v898 = vadd.f32 %v875, %v897
        %v899 = vsel %vm895, -1.0, %v876
        %900 = vmax.xlane.f32.xlu0 %v899
        %v901 = vpop.xlane.xlu0 %900
        %vm902 = vcmp.eq.f32.partialorder %v899, %v901
        %v903 = vsel %vm902, %v614, 128
        %v904 = vand.u32 %v903, 65535
        %v905 = vshra.s32 %v903, 16
        %v906 = vcvt.s32.f32 %v904
        %v907 = vcvt.s32.f32 %v905
        %908 = vmin.xlane.f32.xlu0 %v907
        %v909 = vpop.xlane.xlu0 %908
        %vm910 = vcmp.eq.f32.partialorder %v907, %v909
        %v911 = vsel %vm910, %v906, inf
        %912 = vmin.xlane.f32.xlu0 %v911
        %v913 = vpop.xlane.xlu0 %912
        %v914 = vcvt.f32.s32 %v913
        %v915 = vcvt.f32.s32 %v909
        %v916 = vshll.u32 %v915, 16
        %v917 = vadd.s32 %v916, %v914
        %vm918 = vcmp.eq.s32.totalorder %v614, %v917
        %v919 = vsel %vm918, 1, 0
        %v920 = vcvt.s32.f32 %v919
        %v921 = vadd.f32 %v898, %v920
        %v922 = vsel %vm918, -1.0, %v899
        %923 = vmax.xlane.f32.xlu0 %v922
        %v924 = vpop.xlane.xlu0 %923
        %vm925 = vcmp.eq.f32.partialorder %v922, %v924
        %v926 = vsel %vm925, %v614, 128
        %v927 = vand.u32 %v926, 65535
        %v928 = vshra.s32 %v926, 16
        %v929 = vcvt.s32.f32 %v927
        %v930 = vcvt.s32.f32 %v928
        %931 = vmin.xlane.f32.xlu0 %v930
        %v932 = vpop.xlane.xlu0 %931
        %vm933 = vcmp.eq.f32.partialorder %v930, %v932
        %v934 = vsel %vm933, %v929, inf
        %935 = vmin.xlane.f32.xlu0 %v934
        %v936 = vpop.xlane.xlu0 %935
        %v937 = vcvt.f32.s32 %v936
        %v938 = vcvt.f32.s32 %v932
        %v939 = vshll.u32 %v938, 16
        %v940 = vadd.s32 %v939, %v937
        %vm941 = vcmp.eq.s32.totalorder %v614, %v940
        %v942 = vsel %vm941, 1, 0
        %v943 = vcvt.s32.f32 %v942
        %v944 = vadd.f32 %v921, %v943
        %v945 = vsel %vm941, -1.0, %v922
        %946 = vmax.xlane.f32.xlu0 %v945
        %v947 = vpop.xlane.xlu0 %946
        %vm948 = vcmp.eq.f32.partialorder %v945, %v947
        %v949 = vsel %vm948, %v614, 128
        %v950 = vand.u32 %v949, 65535
        %v951 = vshra.s32 %v949, 16
        %v952 = vcvt.s32.f32 %v950
        %v953 = vcvt.s32.f32 %v951
        %954 = vmin.xlane.f32.xlu0 %v953
        %v955 = vpop.xlane.xlu0 %954
        %vm956 = vcmp.eq.f32.partialorder %v953, %v955
        %v957 = vsel %vm956, %v952, inf
        %958 = vmin.xlane.f32.xlu0 %v957
        %v959 = vpop.xlane.xlu0 %958
        %v960 = vcvt.f32.s32 %v959
        %v961 = vcvt.f32.s32 %v955
        %v962 = vshll.u32 %v961, 16
        %v963 = vadd.s32 %v962, %v960
        %vm964 = vcmp.eq.s32.totalorder %v614, %v963
        %v965 = vsel %vm964, 1, 0
        %v966 = vcvt.s32.f32 %v965
        %v967 = vadd.f32 %v944, %v966
        %v968 = vsel %vm964, -1.0, %v945
        %969 = vmax.xlane.f32.xlu0 %v968
        %v970 = vpop.xlane.xlu0 %969
        %vm971 = vcmp.eq.f32.partialorder %v968, %v970
        %v972 = vsel %vm971, %v614, 128
        %v973 = vand.u32 %v972, 65535
        %v974 = vshra.s32 %v972, 16
        %v975 = vcvt.s32.f32 %v973
        %v976 = vcvt.s32.f32 %v974
        %977 = vmin.xlane.f32.xlu0 %v976
        %v978 = vpop.xlane.xlu0 %977
        %vm979 = vcmp.eq.f32.partialorder %v976, %v978
        %v980 = vsel %vm979, %v975, inf
        %981 = vmin.xlane.f32.xlu0 %v980
        %v982 = vpop.xlane.xlu0 %981
        %v983 = vcvt.f32.s32 %v982
        %v984 = vcvt.f32.s32 %v978
        %v985 = vshll.u32 %v984, 16
        %v986 = vadd.s32 %v985, %v983
        %vm987 = vcmp.eq.s32.totalorder %v614, %v986
        %v988 = vsel %vm987, 1, 0
        %v989 = vcvt.s32.f32 %v988
        %v990 = vadd.f32 %v967, %v989
        %v991 = vmul.f32 %v990, %v612
        %v992 = vlaneseq
        %v993 = vshrl.u32 %v992, 7
        %v994 = vrot.slane %v991, 4
        %v995 = vadd.f32 %v991, %v994
        %v996 = vrot.slane %v995, 2
        %v997 = vadd.f32 %v995, %v996
        %v998 = vrot.slane %v997, 1
        %v999 = vadd.f32 %v997, %v998
        %v1000 = vrot.slane %v803, 4
        %v1001 = vmax.f32 %v803, %v1000
        %v1002 = vrot.slane %v1001, 2
        %v1003 = vmax.f32 %v1001, %v1002
        %v1004 = vrot.slane %v1003, 1
        %v1005 = vmax.f32 %v1003, %v1004
        %vm1006 = vcmp.eq.f32.partialorder %v803, %v1005
        %v1007 = vsel %vm1006, %v993, 8
        %v1008 = vrot.slane %v1007, 4
        %vm1009 = vcmp.lt.s32.totalorder %v1007, %v1008
        %v1010 = vsel %vm1009, %v1007, %v1008
        %v1011 = vrot.slane %v1010, 2
        %vm1012 = vcmp.lt.s32.totalorder %v1010, %v1011
        %v1013 = vsel %vm1012, %v1010, %v1011
        %v1014 = vrot.slane %v1013, 1
        %vm1015 = vcmp.lt.s32.totalorder %v1013, %v1014
        %v1016 = vsel %vm1015, %v1013, %v1014
        %vm1017 = vcmp.eq.s32.totalorder %v993, %v1016
        %v1018 = vsel %vm1017, 1, 0
        %v1019 = vcvt.s32.f32 %v1018
        %vm1020 = vcmp.gt.f32.partialorder %v999, 1.0
        %v1021 = vsel %vm1020, 1, 0
        %vm1022 = vcmp.eq.s32.totalorder %v1021, 1
        %v1023 = vsel %vm1022, %v1019, %v991
        %v1024 = vrot.slane %v1023, 4
        %v1025 = vmax.f32 %v1023, %v1024
        %v1026 = vrot.slane %v1025, 2
        %v1027 = vmax.f32 %v1025, %v1026
        %v1028 = vrot.slane %v1027, 1
        %v1029 = vmax.f32 %v1027, %v1028
        %vm1030 = vcmp.eq.f32.partialorder %v1023, %v1029
        %v1031 = vsel %vm1030, %v993, 8
        %v1032 = vrot.slane %v1031, 4
        %vm1033 = vcmp.lt.s32.totalorder %v1031, %v1032
        %v1034 = vsel %vm1033, %v1031, %v1032
        %v1035 = vrot.slane %v1034, 2
        %vm1036 = vcmp.lt.s32.totalorder %v1034, %v1035
        %v1037 = vsel %vm1036, %v1034, %v1035
        %v1038 = vrot.slane %v1037, 1
        %vm1039 = vcmp.lt.s32.totalorder %v1037, %v1038
        %v1040 = vsel %vm1039, %v1037, %v1038
        %vm1041 = vcmp.eq.s32.totalorder %v993, %v1040
        %v1042 = vsel %vm1041, 1, 0
        %v1043 = vcvt.s32.f32 %v1042
        %v1044 = vcvt.s32.f32 %v573
        %vm1045 = vcmask 64512
        %v1047 = vsel %vm1045, %v1044, 0
        %1049 = vmatpush.msra.mxu0 0.0
        %1050 = vmatpush.msra.mxu0 0.0
        %1051 = vmatpush.msra.mxu0 0.0
        %1052 = vmatpush.msra.mxu0 0.0
        %1053 = vmatpush.msra.mxu0 0.0
        %1054 = vmatpush.msra.mxu0 0.0
        %1055 = vmatpush.msra.mxu0 0.0
        %1056 = vmatpush.msra.mxu0 0.0
        %1057 = vmatpush.msra.mxu0 0.0
        %1058 = vmatpush.msra.mxu0 0.0
        %1059 = vmatpush.msra.mxu0 0.0
        %1060 = vmatpush.msra.mxu0 0.0
        %1061 = vmatpush.msra.mxu0 0.0
        %1062 = vmatpush.msra.mxu0 0.0
        %1063 = vmatpush.msra.mxu0 0.0
        %1064 = vmatpush.msra.mxu0 %v1043
        %1065 = vmatmul.f32.gmra.mxu0 %v1047
        %v1066 = vpop.f32.mrf.mxu0
        %v1067 = vadd.f32 0.0, %v1066
        %1068 = vdwg.mxu0
        %v1070 = vsel %vm1045, %v575, 0
        %1072 = vmatpush.msra.mxu0 0.0
        %1073 = vmatpush.msra.mxu0 0.0
        %1074 = vmatpush.msra.mxu0 0.0
        %1075 = vmatpush.msra.mxu0 0.0
        %1076 = vmatpush.msra.mxu0 0.0
        %1077 = vmatpush.msra.mxu0 0.0
        %1078 = vmatpush.msra.mxu0 0.0
        %1079 = vmatpush.msra.mxu0 0.0
        %1080 = vmatpush.msra.mxu0 0.0
        %1081 = vmatpush.msra.mxu0 0.0
        %1082 = vmatpush.msra.mxu0 0.0
        %1083 = vmatpush.msra.mxu0 0.0
        %1084 = vmatpush.msra.mxu0 0.0
        %1085 = vmatpush.msra.mxu0 0.0
        %1086 = vmatpush.msra.mxu0 0.0
        %1087 = vmatpush.msra.mxu0 %v1043
        %1088 = vmatmul.f32.gmra.mxu0 %v1070
        %v1089 = vpop.f32.mrf.mxu0
        %v1090 = vadd.f32 0.0, %v1089
        %1091 = vdwg.mxu0
        %v1092 = vmul.f32 %v807, %v1023
        %1093 = vmax.xlane.f32.xlu0 %v1092
        %v1094 = vpop.xlane.xlu0 %1093
        %v1095 = vmul.f32 %v803, %v1023
        %1096 = vmax.xlane.f32.xlu0 %v1095
        %v1097 = vpop.xlane.xlu0 %1096
        %v1098 = vadd.f32 %v1094, 1e-09
        %v1099 = vrcp.pop %v1098
        %v1100 = vmul.f32 %v1097, %v1099
        %v1101 = vmul.f32 %v1092, %v1100
        %v1102 = vrot.slane %v1101, 4
        %v1103 = vmax.f32 %v1101, %v1102
        %v1104 = vrot.slane %v1103, 2
        %v1105 = vmax.f32 %v1103, %v1104
        %v1106 = vrot.slane %v1105, 1
        %v1107 = vmax.f32 %v1105, %v1106
        %vm1108 = vcmp.gt.f32.partialorder %v1029, 0.0
        %v1109 = vsel %vm1108, %v1107, 0.0
        %v1110 = vmul.f32 %v1043, %v1109
        %v1111 = vadd.s32 %v993, 8
        %v1112 = vperm.slane %v573, 0
        %vm1113 = vcmp.eq.s32.totalorder %v993, %v1112
        %vm1114 = vcmp.eq.s32.totalorder %v1111, %v1112
        %v1115 = vsel %vm1113, 1, 0
        %v1116 = vsel %vm1114, 1, 0
        %v1117 = vcvt.s32.f32 %v1115
        %v1118 = vcvt.s32.f32 %v1116
        %v1120 = vsel %vm1045, %v1117, 0
        %v1123 = vsel %vm1045, %v1118, 0
        %1125 = vmatpush.msra.mxu0 0.0
        %1126 = vmatpush.msra.mxu0 0.0
        %1127 = vmatpush.msra.mxu0 0.0
        %1128 = vmatpush.msra.mxu0 0.0
        %1129 = vmatpush.msra.mxu0 0.0
        %1130 = vmatpush.msra.mxu0 0.0
        %1131 = vmatpush.msra.mxu0 0.0
        %1132 = vmatpush.msra.mxu0 0.0
        %1133 = vmatpush.msra.mxu0 0.0
        %1134 = vmatpush.msra.mxu0 0.0
        %1135 = vmatpush.msra.mxu0 0.0
        %1136 = vmatpush.msra.mxu0 0.0
        %1137 = vmatpush.msra.mxu0 0.0
        %1138 = vmatpush.msra.mxu0 0.0
        %1139 = vmatpush.msra.mxu0 0.0
        %1140 = vmatpush.msra.mxu0 %v1110
        %1141 = vmatmul.f32.gmra.mxu0 %v1120
        %v1142 = vpop.f32.mrf.mxu0
        %v1143 = vadd.f32 0.0, %v1142
        %1144 = vmatmul.f32.gmra.mxu0 %v1123
        %v1145 = vpop.f32.mrf.mxu0
        %v1146 = vadd.f32 0.0, %v1145
        %1147 = vdwg.mxu0
        %v1148 = vcvt.f32.s32.to.zero.pseudo %v1067
        %1149 = vst [vmem:[%s512] sm:$0x1] %v1148
        %1150 = vst [vmem:[%s519] sm:$0xf] %v1090
        %1151 = vst [vmem:[%s526] sm:$0xff] %v1143
        %1152 = vst [vmem:[%s526 + $0x8] sm:$0xff] %v1146
        %1153 = vst [vmem:[%s532] sm:$0x1] %v1029
        %1154 = vst [vmem:[%s538] sm:$0x1] %v1040
        %s1155 = sand.u32 %s247, 1
        %s1156 = scalar_lea.sflag [#allocation4], %s1155
        %s1157 = sand.u32 %s247, 1
        %s1158 = scalar_lea.vmem [#allocation5], %s1157
        %s1159 = sand.u32 %s36, 1
        %s1160 = scalar_lea.sflag [#allocation7], %s1159
        %s1161 = sand.u32 %s273, 1
        %s1162 = smul.addr %s1161, 4
        %s1163 = scalar_lea.vmem [#allocation6], %s1162
        %s1164 = sand.u32 %s36, 1
        %s1165 = scalar_lea.sflag [#allocation7], %s1164
        %s1166 = sand.u32 %s299, 1
        %s1167 = smul.addr %s1166, 16
        %s1168 = scalar_lea.vmem [#allocation8], %s1167
        %s1169 = sand.u32 %s36, 1
        %s1170 = scalar_lea.sflag [#allocation10], %s1169
        %s1171 = sand.u32 %s325, 1
        %s1172 = scalar_lea.vmem [#allocation9], %s1171
        %s1173 = sand.u32 %s36, 1
        %s1174 = scalar_lea.sflag [#allocation10], %s1173
        %s1175 = sand.u32 %s351, 1
        %s1176 = scalar_lea.vmem [#allocation11], %s1175
        // Predicated region
        $region57: #{tpu_custom_call.1} parent=51 // pred_check
          %p1177 = pneg %p257
        $region58: #{tpu_custom_call.1} parent=51 // pred_check_branch
          %1179 = sbr.rel (%p1177) target = $region60
        $region59: #{tpu_custom_call.1} parent=51 // pred_region
          %1181 = vsyncadd %s1156, 0
          %s1182 = scalar_lea.hbm %s8, %s36
          %s1184 = sshll.u32 %s1158, 4
          %s1185 = int_to_ptr.vmem [resolvable:$true] %s1184
          %s1186 = sshll.u32 %s1182, 4
          %s1187 = int_to_ptr.hbm [resolvable:$true] %s1186
          %1189 = dma.vmem_to_hbm [thread:$0]  %s1185, 16, %s1187, %s1156
        $region60: #{tpu_custom_call.1} parent=51 // pred_fallthru
          _
        // Predicated region
        $region61: #{tpu_custom_call.1} parent=51 // pred_check
          %p1190 = pneg %p283
        $region62: #{tpu_custom_call.1} parent=51 // pred_check_branch
          %1192 = sbr.rel (%p1190) target = $region64
        $region63: #{tpu_custom_call.1} parent=51 // pred_region
          %1194 = vsyncadd %s1160, 0
          %s1195 = smul.addr %s36, 4
          %s1196 = scalar_lea.hbm %s9, %s1195
          %s1198 = sshll.u32 %s1163, 4
          %s1199 = int_to_ptr.vmem [resolvable:$true] %s1198
          %s1200 = sshll.u32 %s1196, 4
          %s1201 = int_to_ptr.hbm [resolvable:$true] %s1200
          %1203 = dma.vmem_to_hbm [thread:$0]  %s1199, 64, %s1201, %s1160
        $region64: #{tpu_custom_call.1} parent=51 // pred_fallthru
          _
        // Predicated region
        $region65: #{tpu_custom_call.1} parent=51 // pred_check
          %p1204 = pneg %p309
        $region66: #{tpu_custom_call.1} parent=51 // pred_check_branch
          %1206 = sbr.rel (%p1204) target = $region68
        $region67: #{tpu_custom_call.1} parent=51 // pred_region
          %1208 = vsyncadd %s1165, 0
          %s1209 = smul.addr %s36, 2
          %s1210 = smul.addr %s1209, 8
          %s1211 = scalar_lea.hbm %s10, %s1210
          %s1212 = sshll.u32 %s1168, 4
          %s1213 = int_to_ptr.vmem [resolvable:$true] %s1212
          %s1214 = sshll.u32 %s1211, 4
          %s1215 = int_to_ptr.hbm [resolvable:$true] %s1214
          %1220 = dma.vmem_to_hbm [thread:$0]  %s1213, 256, %s1215, %s1165, 128, 128, 8
        $region68: #{tpu_custom_call.1} parent=51 // pred_fallthru
          _
        // Predicated region
        $region69: #{tpu_custom_call.1} parent=51 // pred_check
          %p1221 = pneg %p335
        $region70: #{tpu_custom_call.1} parent=51 // pred_check_branch
          %1223 = sbr.rel (%p1221) target = $region72
        $region71: #{tpu_custom_call.1} parent=51 // pred_region
          %1225 = vsyncadd %s1170, 0
          %s1226 = scalar_lea.hbm %s11, %s36
          %s1228 = sshll.u32 %s1172, 4
          %s1229 = int_to_ptr.vmem [resolvable:$true] %s1228
          %s1230 = sshll.u32 %s1226, 4
          %s1231 = int_to_ptr.hbm [resolvable:$true] %s1230
          %1233 = dma.vmem_to_hbm [thread:$0]  %s1229, 16, %s1231, %s1170
        $region72: #{tpu_custom_call.1} parent=51 // pred_fallthru
          _
        // Predicated region
        $region73: #{tpu_custom_call.1} parent=51 // pred_check
          %p1234 = pneg %p361
        $region74: #{tpu_custom_call.1} parent=51 // pred_check_branch
          %1236 = sbr.rel (%p1234) target = $region76
        $region75: #{tpu_custom_call.1} parent=51 // pred_region
          %1238 = vsyncadd %s1174, 0
          %s1239 = scalar_lea.hbm %s12, %s36
          %s1241 = sshll.u32 %s1176, 4
          %s1242 = int_to_ptr.vmem [resolvable:$true] %s1241
          %s1243 = sshll.u32 %s1239, 4
          %s1244 = int_to_ptr.hbm [resolvable:$true] %s1243
          %1246 = dma.vmem_to_hbm [thread:$0]  %s1242, 16, %s1244, %s1174
        $region76: #{tpu_custom_call.1} parent=51 // pred_fallthru
          _
      $region52: #{tpu_custom_call.1} parent=5 // pred_fallthru
        _
      %p1247 = scmp.le.s32.totalorder 2, %s31
      // Predicated region
      $region77: #{tpu_custom_call.1} parent=5 // pred_check
        %p1248 = pneg %p1247
      $region78: #{tpu_custom_call.1} parent=5 // pred_check_branch
        %1250 = sbr.rel (%p1248) target = $region80
      $region79: #{tpu_custom_call.1} parent=5 // pred_region
        %s1251 = ssub.s32 %s31, 2
        // Predicated region
        $region81: #{tpu_custom_call.1} parent=79 // pred_check
          %p1252 = pneg %p263
        $region82: #{tpu_custom_call.1} parent=79 // pred_check_branch
          %1254 = sbr.rel (%p1252) target = $region84
        $region83: #{tpu_custom_call.1} parent=79 // pred_region
          %s1255 = sand.u32 %s248, 1
          %s1256 = scalar_lea.sflag [#allocation4], %s1255
          %s1257 = sand.u32 %s248, 1
          %s1258 = scalar_lea.vmem [#allocation5], %s1257
          %1260 = dma.done %s1256, 16
        $region84: #{tpu_custom_call.1} parent=79 // pred_fallthru
          _
        // Predicated region
        $region85: #{tpu_custom_call.1} parent=79 // pred_check
          %p1261 = pneg %p289
        $region86: #{tpu_custom_call.1} parent=79 // pred_check_branch
          %1263 = sbr.rel (%p1261) target = $region88
        $region87: #{tpu_custom_call.1} parent=79 // pred_region
          %s1264 = sand.u32 %s37, 1
          %s1265 = scalar_lea.sflag [#allocation7], %s1264
          %s1266 = sand.u32 %s274, 1
          %s1267 = smul.addr %s1266, 4
          %s1268 = scalar_lea.vmem [#allocation6], %s1267
          %1270 = dma.done %s1265, 64
        $region88: #{tpu_custom_call.1} parent=79 // pred_fallthru
          _
        // Predicated region
        $region89: #{tpu_custom_call.1} parent=79 // pred_check
          %p1271 = pneg %p315
        $region90: #{tpu_custom_call.1} parent=79 // pred_check_branch
          %1273 = sbr.rel (%p1271) target = $region92
        $region91: #{tpu_custom_call.1} parent=79 // pred_region
          %s1274 = sand.u32 %s37, 1
          %s1275 = scalar_lea.sflag [#allocation7], %s1274
          %s1276 = sand.u32 %s300, 1
          %s1277 = smul.addr %s1276, 16
          %s1278 = scalar_lea.vmem [#allocation8], %s1277
          %1280 = dma.done %s1275, 256
        $region92: #{tpu_custom_call.1} parent=79 // pred_fallthru
          _
        // Predicated region
        $region93: #{tpu_custom_call.1} parent=79 // pred_check
          %p1281 = pneg %p341
        $region94: #{tpu_custom_call.1} parent=79 // pred_check_branch
          %1283 = sbr.rel (%p1281) target = $region96
        $region95: #{tpu_custom_call.1} parent=79 // pred_region
          %s1284 = sand.u32 %s37, 1
          %s1285 = scalar_lea.sflag [#allocation10], %s1284
          %s1286 = sand.u32 %s326, 1
          %s1287 = scalar_lea.vmem [#allocation9], %s1286
          %1289 = dma.done %s1285, 16
        $region96: #{tpu_custom_call.1} parent=79 // pred_fallthru
          _
        // Predicated region
        $region97: #{tpu_custom_call.1} parent=79 // pred_check
          %p1290 = pneg %p367
        $region98: #{tpu_custom_call.1} parent=79 // pred_check_branch
          %1292 = sbr.rel (%p1290) target = $region100
        $region99: #{tpu_custom_call.1} parent=79 // pred_region
          %s1293 = sand.u32 %s37, 1
          %s1294 = scalar_lea.sflag [#allocation10], %s1293
          %s1295 = sand.u32 %s352, 1
          %s1296 = scalar_lea.vmem [#allocation11], %s1295
          %1298 = dma.done %s1294, 16
        $region100: #{tpu_custom_call.1} parent=79 // pred_fallthru
          _
      $region80: #{tpu_custom_call.1} parent=5 // pred_fallthru
        _
    $region6: #{tpu_custom_call.1} parent=1 // loop_footer
      %s35 = sadd.s32 1, %s31
    $region7: #{tpu_custom_call.1} parent=1 // loop_footer_branch
      %30 = sbr.rel target = $region3
    $region8: #{tpu_custom_call.1} parent=1 // loop_exit
      _
    %1299 = vsyncpa [#allocation3], 1
    %s1300 = scalar_lea.sflag [#allocation3], 1
    %1301 = vsyncpa %s1300, 1
    %1302 = vsyncpa [#allocation4], 1
    %s1303 = scalar_lea.sflag [#allocation4], 1
    %1304 = vsyncpa %s1303, 1
    %1305 = vsyncpa [#allocation7], 1
    %s1306 = scalar_lea.sflag [#allocation7], 1
    %1307 = vsyncpa %s1306, 1
    %1308 = vsyncpa [#allocation10], 1
    %s1309 = scalar_lea.sflag [#allocation10], 1
    %1310 = vsyncpa %s1309, 1

</llo_original>
